<compile_context>
chip_gen: v7x
topology: tpu7x:2x2x1
jax: 0.10.0
libtpu: 0.0.40
codegen_flags: <defaults>
</compile_context>

<pallas_src>
import functools
import math

import jax
import jax.numpy as jnp
from jax import lax
from jax.experimental import pallas as pl
from jax.experimental.pallas import tpu as pltpu


# ---------------------------------------------------------------------------
# Helpers
# ---------------------------------------------------------------------------
def _pick_block(dim: int, preferred: int, align: int) -> int:
    """Largest tile <= preferred that divides `dim` and respects `align`.
    Falls back to the full dimension (always a legal block shape)."""
    if dim <= preferred:
        return dim
    for cand in range(preferred, align - 1, -1):
        if cand % align == 0 and dim % cand == 0:
            return cand
    # TODO(synk): prime/odd dims fall back to a full-dim block; pad+mask would be better.
    return dim


@functools.lru_cache(maxsize=None)
def _vmem_budget_bytes() -> int:
    """80% of physical per-core VMEM (v7x: ~51 MiB, v5e/v6e: ~102 MiB)."""
    cap = 64 << 20  # conservative default (v7x per-TC VMEM)
    try:
        info = pltpu.get_tpu_info()
        cap = int(getattr(info, "vmem_capacity_bytes", cap) or cap)
    except Exception:
        pass
    return int(cap * 0.8)


def _head_group(num_heads: int, head_dim: int) -> int:
    """Heads packed per block so the block lane dim (G*Dh) is a multiple of 128,
    or the whole D (always a legal last block dim) when no such divisor of H exists."""
    if head_dim % 128 == 0:
        return 1
    for g in range(1, num_heads + 1):
        if num_heads % g == 0 and (g * head_dim) % 128 == 0:
            return g
    return num_heads


# ---------------------------------------------------------------------------
# Kernel 1: flash-style scaled-dot-product attention (online softmax)
#   Blocks on (B, S, D): q/o (1, tq, G*Dh), k/v (1, tk, G*Dh)  (G heads per block)
#   Scratch: scaled-q (tq, G*Dh), m (G, tq, 1) f32, l (G, tq, 1) f32, acc (G, tq, Dh) f32
# ---------------------------------------------------------------------------
def _flash_attn_kernel(q_ref, k_ref, v_ref, o_ref, qs_sc, m_sc, l_sc, acc_sc, *,
                       scale, group, head_dim, kv_axis, bf16_exp):
    ki = pl.program_id(kv_axis)

    @pl.when(ki == 0)
    def _init():
        # q*scale hoisted: executed once per q tile, not once per kv step.
        qs_sc[...] = (q_ref[0] * scale).astype(qs_sc.dtype)
        m_sc[...] = jnp.full(m_sc.shape, -jnp.inf, dtype=jnp.float32)
        l_sc[...] = jnp.zeros(l_sc.shape, dtype=jnp.float32)
        acc_sc[...] = jnp.zeros(acc_sc.shape, dtype=jnp.float32)

    k = k_ref[0]                                                     # (tk, G*Dh)
    v = v_ref[0]                                                     # (tk, G*Dh)
    p_dtype = jnp.bfloat16 if bf16_exp else jnp.float32

    for g in range(group):                                           # unrolled, static slices
        sl = slice(g * head_dim, (g + 1) * head_dim)
        q_g = qs_sc[:, sl]                                           # (tq, Dh) scaled
        k_g = k[:, sl]
        v_g = v[:, sl]

        # s = q @ k^T without materializing a transposed copy of k; f32 MXU accumulation.
        s = lax.dot_general(q_g, k_g, (((1,), (1,)), ((), ())),
                            preferred_element_type=jnp.float32)      # (tq, tk) f32

        m_prev = m_sc[g]                                             # (tq, 1)
        m_new = jnp.maximum(m_prev, jnp.max(s, axis=-1, keepdims=True))
        alpha = jnp.exp(m_prev - m_new)                              # (tq, 1) f32
        # bf16 exp on bf16 inputs (v6e/v7x EUP bf16 path); statistics stay f32.
        p = jnp.exp((s - m_new).astype(p_dtype))                     # (tq, tk)

        l_sc[g] = alpha * l_sc[g] + jnp.sum(p.astype(jnp.float32),
                                            axis=-1, keepdims=True)
        acc_sc[g] = alpha * acc_sc[g] + jnp.dot(
            p.astype(v.dtype), v_g, preferred_element_type=jnp.float32)
        m_sc[g] = m_new

    # TODO(synk): attention dropout omitted (inference semantics / dropout=0.0)

    @pl.when(ki == pl.num_programs(kv_axis) - 1)
    def _finalize():
        for g in range(group):
            sl = slice(g * head_dim, (g + 1) * head_dim)
            inv_l = pl.reciprocal(l_sc[g], approx=True)              # EUP slot
            o_ref[0, :, sl] = (acc_sc[g] * inv_l).astype(o_ref.dtype)


def _attn_vmem_need(tq, tk, gdh, item, group):
    io = 2 * (2 * tq * gdh + 2 * tk * gdh) * item          # double-buffered q/o + k/v blocks
    scratch = (tq * gdh * item                              # scaled-q scratch
               + 2 * group * tq * 128 * 4                   # m / l (lane-padded)
               + tq * gdh * 4)                              # f32 accumulator
    interm = 6 * tq * tk * 4                                # s / p / exp temporaries (f32)
    return io + scratch + interm + (8 << 20)                # headroom


def _attn_tiles(Sq, Sk, gdh, item, group, budget):
    sub = max(8, 32 // item)                                # f32→8, bf16→16, int8→32
    tq_cands = []
    for c in (512, 256, 128, 64, 32, 16, 8):
        b = _pick_block(Sq, c, sub)
        if b not in tq_cands:
            tq_cands.append(b)
    tk_cands = [Sk]                                         # full Sk first: K/V stay resident
    for c in (2048, 1024, 512, 256, 128):
        b = _pick_block(Sk, c, 128)
        if b not in tk_cands:
            tk_cands.append(b)
    primary_tq = [t for t in tq_cands if t >= min(128, Sq)] or tq_cands
    for tq_list in (primary_tq, tq_cands):
        for tk in tk_cands:
            for tq in tq_list:
                if _attn_vmem_need(tq, tk, gdh, item, group) <= budget:
                    return tq, tk
    return tq_cands[-1], tk_cands[-1]


def _attn_cost(bh, sq, sk, dh, itemsize):
    return pl.CostEstimate(
        flops=4 * bh * sq * sk * dh,
        transcendentals=bh * sq * sk,
        bytes_accessed=(2 * bh * sq * dh + 2 * bh * sk * dh) * itemsize)


def _flash_attention(q, k, v, *, num_heads):
    """q, k, v: (B, S, D) — heads packed G-per-block, no fold/unfold transposes."""
    B, Sq, D = q.shape
    Sk = k.shape[1]
    H = num_heads
    Dh = D // H
    G = _head_group(H, Dh)
    gdh = G * Dh
    item = jnp.dtype(q.dtype).itemsize
    budget = _vmem_budget_bytes()
    tq, tk = _attn_tiles(Sq, Sk, gdh, item, G, budget)
    scale = 1.0 / math.sqrt(Dh)
    bf16_exp = bool(q.dtype == jnp.bfloat16)

    kernel = functools.partial(_flash_attn_kernel, scale=scale, group=G,
                               head_dim=Dh, kv_axis=3, bf16_exp=bf16_exp)

    q_spec = pl.BlockSpec((1, tq, gdh), lambda b, hg, qi, ki: (b, qi, hg))
    kv_spec = pl.BlockSpec((1, tk, gdh), lambda b, hg, qi, ki: (b, ki, hg))
    o_spec = pl.BlockSpec((1, tq, gdh), lambda b, hg, qi, ki: (b, qi, hg))

    return pl.pallas_call(
        kernel,
        out_shape=jax.ShapeDtypeStruct((B, Sq, D), q.dtype),
        grid_spec=pltpu.PrefetchScalarGridSpec(
            num_scalar_prefetch=0,
            grid=(B, H // G, Sq // tq, Sk // tk),
            in_specs=[q_spec, kv_spec, kv_spec],
            out_specs=o_spec,
            scratch_shapes=[
                pltpu.VMEM((tq, gdh), q.dtype),          # scaled q (hoisted q*scale)
                pltpu.VMEM((G, tq, 1), jnp.float32),     # m
                pltpu.VMEM((G, tq, 1), jnp.float32),     # l
                pltpu.VMEM((G, tq, Dh), jnp.float32),    # acc
            ]),
        compiler_params=pltpu.CompilerParams(
            dimension_semantics=("parallel", "parallel", "parallel", "arbitrary"),
            vmem_limit_bytes=budget),
        cost_estimate=_attn_cost(B * H, Sq, Sk, Dh, item),
    )(q, k, v)


# ---------------------------------------------------------------------------
# Kernel 2: output projection  y = x @ Wt + b   (PyTorch nn.Linear(D, D))
# ---------------------------------------------------------------------------
def _proj_fused_kernel(x_ref, wt_ref, b_ref, o_ref):
    acc = lax.dot_general(x_ref[...], wt_ref[...], (((1,), (0,)), ((), ())),
                          preferred_element_type=jnp.float32)
    o_ref[...] = (acc + b_ref[...].astype(jnp.float32)).astype(o_ref.dtype)


def _proj_tiled_kernel(x_ref, wt_ref, b_ref, o_ref, acc_ref):
    @pl.when(pl.program_id(2) == 0)
    def _init():
        acc_ref[...] = jnp.zeros(acc_ref.shape, dtype=jnp.float32)

    acc_ref[...] += lax.dot_general(
        x_ref[...], wt_ref[...], (((1,), (0,)), ((), ())),
        preferred_element_type=jnp.float32)

    @pl.when(pl.program_id(2) == pl.num_programs(2) - 1)
    def _finalize():
        o_ref[...] = (acc_ref[...] + b_ref[...]).astype(o_ref.dtype)


def _project(x2d, wt, bias):
    M, K = x2d.shape
    N = wt.shape[1]
    item = jnp.dtype(x2d.dtype).itemsize
    sub = max(8, 32 // item)
    budget = _vmem_budget_bytes()
    cost = pl.CostEstimate(flops=2 * M * N * K, transcendentals=0,
                           bytes_accessed=(M * K + K * N + M * N + N) * item)

    # --- single-pass path: full weight panel resident, no reduction axis ---
    def fused_need(tm_):
        return (2 * (tm_ * K + tm_ * N) * item + 2 * K * N * item
                + 2 * 8 * N * item + tm_ * N * 4 + (8 << 20))

    tm_fused = None
    for c in (512, 256, 128, 64, 32, 16, 8):
        cand = _pick_block(M, c, sub)
        if fused_need(cand) <= budget:
            tm_fused = cand
            break
    if tm_fused is not None:
        return pl.pallas_call(
            _proj_fused_kernel,
            out_shape=jax.ShapeDtypeStruct((M, N), x2d.dtype),
            grid_spec=pltpu.PrefetchScalarGridSpec(
                num_scalar_prefetch=0,
                grid=(M // tm_fused,),
                in_specs=[
                    pl.BlockSpec((tm_fused, K), lambda i: (i, 0)),
                    pl.BlockSpec((K, N), lambda i: (0, 0)),   # constant index -> resident
                    pl.BlockSpec((1, N), lambda i: (0, 0)),
                ],
                out_specs=pl.BlockSpec((tm_fused, N), lambda i: (i, 0))),
            compiler_params=pltpu.CompilerParams(
                dimension_semantics=("parallel",),
                vmem_limit_bytes=budget),
            cost_estimate=cost,
        )(x2d, wt, bias)

    # --- fallback for large D: 3-axis tiled matmul with f32 accumulator ---
    def tiled_need(tm_, tn_, tk_):
        return (2 * (tm_ * tk_ + tk_ * tn_ + tm_ * tn_) * item
                + 2 * 8 * tn_ * item + tm_ * tn_ * 4 + (8 << 20))

    tm = tn = tk = None
    for cn in (512, 256, 128):
        for ck in (1024, 512, 256, 128):
            for cm in (512, 256, 128, 64, 32, 16, 8):
                a = _pick_block(M, cm, sub)
                nn_ = _pick_block(N, cn, 128)
                kk_ = _pick_block(K, ck, 128)
                if tiled_need(a, nn_, kk_) <= budget:
                    tm, tn, tk = a, nn_, kk_
                    break
            if tm is not None:
                break
        if tm is not None:
            break
    if tm is None:
        tm, tn, tk = _pick_block(M, 128, sub), _pick_block(N, 128, 128), _pick_block(K, 128, 128)

    return pl.pallas_call(
        _proj_tiled_kernel,
        out_shape=jax.ShapeDtypeStruct((M, N), x2d.dtype),
        grid_spec=pltpu.PrefetchScalarGridSpec(
            num_scalar_prefetch=0,
            grid=(M // tm, N // tn, K // tk),
            in_specs=[
                pl.BlockSpec((tm, tk), lambda i, j, kk: (i, kk)),
                pl.BlockSpec((tk, tn), lambda i, j, kk: (kk, j)),
                pl.BlockSpec((1, tn), lambda i, j, kk: (0, j)),
            ],
            out_specs=pl.BlockSpec((tm, tn), lambda i, j, kk: (i, j)),
            scratch_shapes=[pltpu.VMEM((tm, tn), jnp.float32)]),
        compiler_params=pltpu.CompilerParams(
            dimension_semantics=("parallel", "parallel", "arbitrary"),
            vmem_limit_bytes=budget),
        cost_estimate=cost,
    )(x2d, wt, bias)


# ---------------------------------------------------------------------------
# Module wrapper
# ---------------------------------------------------------------------------
class MemoryEfficientAttentionPallas:
    def __init__(self, embed_dim: int, num_heads: int, dropout: float, key):
        assert embed_dim % num_heads == 0
        self.embed_dim = embed_dim
        self.num_heads = num_heads
        self.dropout = dropout  # TODO(synk): attn/residual dropout not applied (eval mode)
        wkey, bkey = jax.random.split(key)
        bound = 1.0 / math.sqrt(embed_dim)  # nn.Linear default init range
        self.proj_w = jax.random.uniform(
            wkey, (embed_dim, embed_dim), jnp.float32, -bound, bound)
        self.proj_wt = self.proj_w.T  # pre-transposed once: kernel does x @ Wt directly
        self.proj_b = jax.random.uniform(
            bkey, (embed_dim,), jnp.float32, -bound, bound)

    def __call__(self, x, k=None, v=None, attention_mask=None):
        if k is None:
            k = x
        if v is None:
            v = x
        assert attention_mask is None  # TODO(synk): attention_mask not supported

        B, Sq, D = x.shape
        y = _flash_attention(x, k, v, num_heads=self.num_heads)      # (B, Sq, D)

        wt = self.proj_wt.astype(x.dtype)
        bias = self.proj_b.reshape(1, D).astype(x.dtype)
        out = _project(y.reshape(B * Sq, D), wt, bias)
        return out.reshape(B, Sq, D)


# ---------------------------------------------------------------------------
# Pure-JAX reference for correctness check
# ---------------------------------------------------------------------------
def _reference(x, w, b, num_heads):
    B, S, D = x.shape
    H = num_heads
    Dh = D // H
    q = x.reshape(B, S, H, Dh).transpose(0, 2, 1, 3)              # (B, H, S, Dh)
    k = q
    v = q
    s = jnp.einsum("bhqd,bhkd->bhqk", q / math.sqrt(Dh), k)
    p = jax.nn.softmax(s, axis=-1)
    o = jnp.einsum("bhqk,bhkd->bhqd", p, v)
    o = o.transpose(0, 2, 1, 3).reshape(B, S, D)
    return o @ w.T + b


if __name__ == "__main__":
    B, S, D, H = 2, 8, 32, 4
    key = jax.random.PRNGKey(0)
    pkey, xkey = jax.random.split(key)

    module = MemoryEfficientAttentionPallas(embed_dim=D, num_heads=H,
                                            dropout=0.0, key=pkey)
    x = jax.random.normal(xkey, (B, S, D), dtype=jnp.float32)

    out = jax.block_until_ready(module(x))

    ref = _reference(x, module.proj_w, module.proj_b, H)
    assert out.shape == (B, S, D)
    # Tolerance loosened slightly vs exact f32: finalize uses the EUP approximate
    # reciprocal (pl.reciprocal(..., approx=True)) for the softmax denominator.
    max_err = float(jnp.max(jnp.abs(out - ref)))
    assert jnp.allclose(out, ref, atol=1e-2, rtol=1e-2), f"max abs err {max_err}"

    print("KERNEL_OK")
</pallas_src>

<mosaic_0001>
module attributes {stable_mosaic.version = 11 : i64} {
  func.func @_flash_attn_kernel(%arg0: i32, %arg1: i32, %arg2: i32, %arg3: i32, %arg4: memref<1x8x32xf32, #tpu.memory_space<vmem>>, %arg5: memref<1x8x32xf32, #tpu.memory_space<vmem>>, %arg6: memref<1x8x32xf32, #tpu.memory_space<vmem>>, %arg7: memref<1x8x32xf32, #tpu.memory_space<vmem>>, %arg8: memref<8x32xf32, #tpu.memory_space<vmem>>, %arg9: memref<4x8x1xf32, #tpu.memory_space<vmem>>, %arg10: memref<4x8x1xf32, #tpu.memory_space<vmem>>, %arg11: memref<4x8x8xf32, #tpu.memory_space<vmem>>) attributes {dimension_semantics = [#tpu.dimension_semantics<parallel>, #tpu.dimension_semantics<parallel>, #tpu.dimension_semantics<parallel>, #tpu.dimension_semantics<arbitrary>], iteration_bounds = array<i64: 2, 1, 1, 1>, scalar_prefetch = 0 : i64, scratch_operands = 4 : i64, tpu.core_type = #tpu.core_type<tc>, window_params = [{transform_indices = @transform_0, window_bounds = array<i64: 1, 8, 32>}, {transform_indices = @transform_1, window_bounds = array<i64: 1, 8, 32>}, {transform_indices = @transform_2, window_bounds = array<i64: 1, 8, 32>}, {transform_indices = @transform_3, window_bounds = array<i64: 1, 8, 32>}]} {
    %c0_i32 = arith.constant 0 : i32
    %0 = arith.cmpi eq, %arg3, %c0_i32 : i32
    %1 = arith.extui %0 : i1 to i32
    %c0_i32_0 = arith.constant 0 : i32
    %2 = arith.cmpi ne, %1, %c0_i32_0 : i32
    scf.if %2 {
      %c0_97 = arith.constant 0 : index
      %c0_98 = arith.constant 0 : index
      %c0_99 = arith.constant 0 : index
      %150 = vector.load %arg4[%c0_97, %c0_98, %c0_99] : memref<1x8x32xf32, #tpu.memory_space<vmem>>, vector<1x8x32xf32>
      %151 = vector.shape_cast %150 : vector<1x8x32xf32> to vector<8x32xf32>
      %cst_100 = arith.constant 0.353553385 : f32
      %152 = vector.broadcast %cst_100 : f32 to vector<8x32xf32>
      %153 = arith.mulf %151, %152 : vector<8x32xf32>
      %c0_101 = arith.constant 0 : index
      %c0_102 = arith.constant 0 : index
      %154 = vector.load %arg8[%c0_101, %c0_102] : memref<8x32xf32, #tpu.memory_space<vmem>>, vector<8x32xf32>
      tpu.vector_store %arg8[%c0_101, %c0_102], %153 {strides = array<i32>} : memref<8x32xf32, #tpu.memory_space<vmem>>, vector<8x32xf32>,
      %cst_103 = arith.constant 0xFF800000 : f32
      %155 = vector.broadcast %cst_103 : f32 to vector<4x8x1xf32>
      %c0_104 = arith.constant 0 : index
      %c0_105 = arith.constant 0 : index
      %c0_106 = arith.constant 0 : index
      %156 = vector.load %arg9[%c0_104, %c0_105, %c0_106] : memref<4x8x1xf32, #tpu.memory_space<vmem>>, vector<4x8x1xf32>
      tpu.vector_store %arg9[%c0_104, %c0_105, %c0_106], %155 {strides = array<i32>} : memref<4x8x1xf32, #tpu.memory_space<vmem>>, vector<4x8x1xf32>,
      %cst_107 = arith.constant 0.000000e+00 : f32
      %157 = vector.broadcast %cst_107 : f32 to vector<4x8x1xf32>
      %c0_108 = arith.constant 0 : index
      %c0_109 = arith.constant 0 : index
      %c0_110 = arith.constant 0 : index
      %158 = vector.load %arg10[%c0_108, %c0_109, %c0_110] : memref<4x8x1xf32, #tpu.memory_space<vmem>>, vector<4x8x1xf32>
      tpu.vector_store %arg10[%c0_108, %c0_109, %c0_110], %157 {strides = array<i32>} : memref<4x8x1xf32, #tpu.memory_space<vmem>>, vector<4x8x1xf32>,
      %cst_111 = arith.constant 0.000000e+00 : f32
      %159 = vector.broadcast %cst_111 : f32 to vector<4x8x8xf32>
      %c0_112 = arith.constant 0 : index
      %c0_113 = arith.constant 0 : index
      %c0_114 = arith.constant 0 : index
      %160 = vector.load %arg11[%c0_112, %c0_113, %c0_114] : memref<4x8x8xf32, #tpu.memory_space<vmem>>, vector<4x8x8xf32>
      tpu.vector_store %arg11[%c0_112, %c0_113, %c0_114], %159 {strides = array<i32>} : memref<4x8x8xf32, #tpu.memory_space<vmem>>, vector<4x8x8xf32>,
    } else {
    }
    %c0 = arith.constant 0 : index
    %c0_1 = arith.constant 0 : index
    %c0_2 = arith.constant 0 : index
    %3 = vector.load %arg5[%c0, %c0_1, %c0_2] : memref<1x8x32xf32, #tpu.memory_space<vmem>>, vector<1x8x32xf32>
    %4 = vector.shape_cast %3 : vector<1x8x32xf32> to vector<8x32xf32>
    %c0_3 = arith.constant 0 : index
    %c0_4 = arith.constant 0 : index
    %c0_5 = arith.constant 0 : index
    %5 = vector.load %arg6[%c0_3, %c0_4, %c0_5] : memref<1x8x32xf32, #tpu.memory_space<vmem>>, vector<1x8x32xf32>
    %6 = vector.shape_cast %5 : vector<1x8x32xf32> to vector<8x32xf32>
    %c0_6 = arith.constant 0 : index
    %c0_7 = arith.constant 0 : index
    %7 = vector.load %arg8[%c0_6, %c0_7] : memref<8x32xf32, #tpu.memory_space<vmem>>, vector<8x8xf32>
    %8 = vector.extract_strided_slice %4 {offsets = [0, 0], sizes = [8, 8], strides = [1, 1]} : vector<8x32xf32> to vector<8x8xf32>
    %9 = vector.extract_strided_slice %6 {offsets = [0, 0], sizes = [8, 8], strides = [1, 1]} : vector<8x32xf32> to vector<8x8xf32>
    %cst = arith.constant dense<0.000000e+00> : vector<8x8xf32>
    %10 = tpu.matmul %7, %8, %cst {dimension_numbers = #tpu.dot_dimension_numbers<[1], [1], [0], [0], [0, 0, 1, 0], [], []>} : vector<8x8xf32>, vector<8x8xf32>, vector<8x8xf32> -> vector<8x8xf32>
    %c0_8 = arith.constant 0 : index
    %c0_9 = arith.constant 0 : index
    %c0_10 = arith.constant 0 : index
    %11 = vector.load %arg9[%c0_8, %c0_9, %c0_10] : memref<4x8x1xf32, #tpu.memory_space<vmem>>, vector<1x8x1xf32>
    %12 = vector.shape_cast %11 : vector<1x8x1xf32> to vector<8x1xf32>
    %cst_11 = arith.constant dense<0xFF800000> : vector<8xf32>
    %13 = vector.multi_reduction <maximumf>, %10, %cst_11 [1] : vector<8x8xf32> to vector<8xf32>
    %14 = vector.shape_cast %13 : vector<8xf32> to vector<8x1xf32>
    %15 = arith.maximumf %12, %14 : vector<8x1xf32>
    %16 = arith.subf %12, %15 : vector<8x1xf32>
    %17 = math.exp %16 : vector<8x1xf32>
    %18 = vector.broadcast %15 : vector<8x1xf32> to vector<8x8xf32>
    %19 = arith.subf %10, %18 : vector<8x8xf32>
    %20 = math.exp %19 : vector<8x8xf32>
    %c0_12 = arith.constant 0 : index
    %c0_13 = arith.constant 0 : index
    %c0_14 = arith.constant 0 : index
    %21 = vector.load %arg10[%c0_12, %c0_13, %c0_14] : memref<4x8x1xf32, #tpu.memory_space<vmem>>, vector<1x8x1xf32>
    %22 = vector.shape_cast %21 : vector<1x8x1xf32> to vector<8x1xf32>
    %23 = arith.mulf %17, %22 : vector<8x1xf32>
    %cst_15 = arith.constant dense<0.000000e+00> : vector<8xf32>
    %24 = vector.multi_reduction <add>, %20, %cst_15 [1] : vector<8x8xf32> to vector<8xf32>
    %25 = vector.shape_cast %24 : vector<8xf32> to vector<8x1xf32>
    %26 = arith.addf %23, %25 : vector<8x1xf32>
    %c0_16 = arith.constant 0 : index
    %c0_17 = arith.constant 0 : index
    %c0_18 = arith.constant 0 : index
    %27 = vector.load %arg10[%c0_16, %c0_17, %c0_18] : memref<4x8x1xf32, #tpu.memory_space<vmem>>, vector<1x8x1xf32>
    %28 = vector.shape_cast %27 : vector<1x8x1xf32> to vector<8x1xf32>
    %29 = vector.shape_cast %26 : vector<8x1xf32> to vector<1x8x1xf32>
    tpu.vector_store %arg10[%c0_16, %c0_17, %c0_18], %29 {strides = array<i32>} : memref<4x8x1xf32, #tpu.memory_space<vmem>>, vector<1x8x1xf32>,
    %c0_19 = arith.constant 0 : index
    %c0_20 = arith.constant 0 : index
    %c0_21 = arith.constant 0 : index
    %30 = vector.load %arg11[%c0_19, %c0_20, %c0_21] : memref<4x8x8xf32, #tpu.memory_space<vmem>>, vector<1x8x8xf32>
    %31 = vector.shape_cast %30 : vector<1x8x8xf32> to vector<8x8xf32>
    %32 = vector.broadcast %17 : vector<8x1xf32> to vector<8x8xf32>
    %33 = arith.mulf %32, %31 : vector<8x8xf32>
    %cst_22 = arith.constant dense<0.000000e+00> : vector<8x8xf32>
    %34 = tpu.matmul %20, %9, %cst_22 {dimension_numbers = #tpu.dot_dimension_numbers<[1], [0], [0], [1], [0, 0, 1, 1], [], []>} : vector<8x8xf32>, vector<8x8xf32>, vector<8x8xf32> -> vector<8x8xf32>
    %35 = arith.addf %33, %34 : vector<8x8xf32>
    %c0_23 = arith.constant 0 : index
    %c0_24 = arith.constant 0 : index
    %c0_25 = arith.constant 0 : index
    %36 = vector.load %arg11[%c0_23, %c0_24, %c0_25] : memref<4x8x8xf32, #tpu.memory_space<vmem>>, vector<1x8x8xf32>
    %37 = vector.shape_cast %36 : vector<1x8x8xf32> to vector<8x8xf32>
    %38 = vector.shape_cast %35 : vector<8x8xf32> to vector<1x8x8xf32>
    tpu.vector_store %arg11[%c0_23, %c0_24, %c0_25], %38 {strides = array<i32>} : memref<4x8x8xf32, #tpu.memory_space<vmem>>, vector<1x8x8xf32>,
    %c0_26 = arith.constant 0 : index
    %c0_27 = arith.constant 0 : index
    %c0_28 = arith.constant 0 : index
    %39 = vector.load %arg9[%c0_26, %c0_27, %c0_28] : memref<4x8x1xf32, #tpu.memory_space<vmem>>, vector<1x8x1xf32>
    %40 = vector.shape_cast %39 : vector<1x8x1xf32> to vector<8x1xf32>
    %41 = vector.shape_cast %15 : vector<8x1xf32> to vector<1x8x1xf32>
    tpu.vector_store %arg9[%c0_26, %c0_27, %c0_28], %41 {strides = array<i32>} : memref<4x8x1xf32, #tpu.memory_space<vmem>>, vector<1x8x1xf32>,
    %c0_29 = arith.constant 0 : index
    %c8 = arith.constant 8 : index
    %42 = vector.load %arg8[%c0_29, %c8] : memref<8x32xf32, #tpu.memory_space<vmem>>, vector<8x8xf32>
    %43 = vector.extract_strided_slice %4 {offsets = [0, 8], sizes = [8, 8], strides = [1, 1]} : vector<8x32xf32> to vector<8x8xf32>
    %44 = vector.extract_strided_slice %6 {offsets = [0, 8], sizes = [8, 8], strides = [1, 1]} : vector<8x32xf32> to vector<8x8xf32>
    %cst_30 = arith.constant dense<0.000000e+00> : vector<8x8xf32>
    %45 = tpu.matmul %42, %43, %cst_30 {dimension_numbers = #tpu.dot_dimension_numbers<[1], [1], [0], [0], [0, 0, 1, 0], [], []>} : vector<8x8xf32>, vector<8x8xf32>, vector<8x8xf32> -> vector<8x8xf32>
    %c1 = arith.constant 1 : index
    %c0_31 = arith.constant 0 : index
    %c0_32 = arith.constant 0 : index
    %46 = vector.load %arg9[%c1, %c0_31, %c0_32] : memref<4x8x1xf32, #tpu.memory_space<vmem>>, vector<1x8x1xf32>
    %47 = vector.shape_cast %46 : vector<1x8x1xf32> to vector<8x1xf32>
    %cst_33 = arith.constant dense<0xFF800000> : vector<8xf32>
    %48 = vector.multi_reduction <maximumf>, %45, %cst_33 [1] : vector<8x8xf32> to vector<8xf32>
    %49 = vector.shape_cast %48 : vector<8xf32> to vector<8x1xf32>
    %50 = arith.maximumf %47, %49 : vector<8x1xf32>
    %51 = arith.subf %47, %50 : vector<8x1xf32>
    %52 = math.exp %51 : vector<8x1xf32>
    %53 = vector.broadcast %50 : vector<8x1xf32> to vector<8x8xf32>
    %54 = arith.subf %45, %53 : vector<8x8xf32>
    %55 = math.exp %54 : vector<8x8xf32>
    %c1_34 = arith.constant 1 : index
    %c0_35 = arith.constant 0 : index
    %c0_36 = arith.constant 0 : index
    %56 = vector.load %arg10[%c1_34, %c0_35, %c0_36] : memref<4x8x1xf32, #tpu.memory_space<vmem>>, vector<1x8x1xf32>
    %57 = vector.shape_cast %56 : vector<1x8x1xf32> to vector<8x1xf32>
    %58 = arith.mulf %52, %57 : vector<8x1xf32>
    %cst_37 = arith.constant dense<0.000000e+00> : vector<8xf32>
    %59 = vector.multi_reduction <add>, %55, %cst_37 [1] : vector<8x8xf32> to vector<8xf32>
    %60 = vector.shape_cast %59 : vector<8xf32> to vector<8x1xf32>
    %61 = arith.addf %58, %60 : vector<8x1xf32>
    %c1_38 = arith.constant 1 : index
    %c0_39 = arith.constant 0 : index
    %c0_40 = arith.constant 0 : index
    %62 = vector.load %arg10[%c1_38, %c0_39, %c0_40] : memref<4x8x1xf32, #tpu.memory_space<vmem>>, vector<1x8x1xf32>
    %63 = vector.shape_cast %62 : vector<1x8x1xf32> to vector<8x1xf32>
    %64 = vector.shape_cast %61 : vector<8x1xf32> to vector<1x8x1xf32>
    tpu.vector_store %arg10[%c1_38, %c0_39, %c0_40], %64 {strides = array<i32>} : memref<4x8x1xf32, #tpu.memory_space<vmem>>, vector<1x8x1xf32>,
    %c1_41 = arith.constant 1 : index
    %c0_42 = arith.constant 0 : index
    %c0_43 = arith.constant 0 : index
    %65 = vector.load %arg11[%c1_41, %c0_42, %c0_43] : memref<4x8x8xf32, #tpu.memory_space<vmem>>, vector<1x8x8xf32>
    %66 = vector.shape_cast %65 : vector<1x8x8xf32> to vector<8x8xf32>
    %67 = vector.broadcast %52 : vector<8x1xf32> to vector<8x8xf32>
    %68 = arith.mulf %67, %66 : vector<8x8xf32>
    %cst_44 = arith.constant dense<0.000000e+00> : vector<8x8xf32>
    %69 = tpu.matmul %55, %44, %cst_44 {dimension_numbers = #tpu.dot_dimension_numbers<[1], [0], [0], [1], [0, 0, 1, 1], [], []>} : vector<8x8xf32>, vector<8x8xf32>, vector<8x8xf32> -> vector<8x8xf32>
    %70 = arith.addf %68, %69 : vector<8x8xf32>
    %c1_45 = arith.constant 1 : index
    %c0_46 = arith.constant 0 : index
    %c0_47 = arith.constant 0 : index
    %71 = vector.load %arg11[%c1_45, %c0_46, %c0_47] : memref<4x8x8xf32, #tpu.memory_space<vmem>>, vector<1x8x8xf32>
    %72 = vector.shape_cast %71 : vector<1x8x8xf32> to vector<8x8xf32>
    %73 = vector.shape_cast %70 : vector<8x8xf32> to vector<1x8x8xf32>
    tpu.vector_store %arg11[%c1_45, %c0_46, %c0_47], %73 {strides = array<i32>} : memref<4x8x8xf32, #tpu.memory_space<vmem>>, vector<1x8x8xf32>,
    %c1_48 = arith.constant 1 : index
    %c0_49 = arith.constant 0 : index
    %c0_50 = arith.constant 0 : index
    %74 = vector.load %arg9[%c1_48, %c0_49, %c0_50] : memref<4x8x1xf32, #tpu.memory_space<vmem>>, vector<1x8x1xf32>
    %75 = vector.shape_cast %74 : vector<1x8x1xf32> to vector<8x1xf32>
    %76 = vector.shape_cast %50 : vector<8x1xf32> to vector<1x8x1xf32>
    tpu.vector_store %arg9[%c1_48, %c0_49, %c0_50], %76 {strides = array<i32>} : memref<4x8x1xf32, #tpu.memory_space<vmem>>, vector<1x8x1xf32>,
    %c0_51 = arith.constant 0 : index
    %c16 = arith.constant 16 : index
    %77 = vector.load %arg8[%c0_51, %c16] : memref<8x32xf32, #tpu.memory_space<vmem>>, vector<8x8xf32>
    %78 = vector.extract_strided_slice %4 {offsets = [0, 16], sizes = [8, 8], strides = [1, 1]} : vector<8x32xf32> to vector<8x8xf32>
    %79 = vector.extract_strided_slice %6 {offsets = [0, 16], sizes = [8, 8], strides = [1, 1]} : vector<8x32xf32> to vector<8x8xf32>
    %cst_52 = arith.constant dense<0.000000e+00> : vector<8x8xf32>
    %80 = tpu.matmul %77, %78, %cst_52 {dimension_numbers = #tpu.dot_dimension_numbers<[1], [1], [0], [0], [0, 0, 1, 0], [], []>} : vector<8x8xf32>, vector<8x8xf32>, vector<8x8xf32> -> vector<8x8xf32>
    %c2 = arith.constant 2 : index
    %c0_53 = arith.constant 0 : index
    %c0_54 = arith.constant 0 : index
    %81 = vector.load %arg9[%c2, %c0_53, %c0_54] : memref<4x8x1xf32, #tpu.memory_space<vmem>>, vector<1x8x1xf32>
    %82 = vector.shape_cast %81 : vector<1x8x1xf32> to vector<8x1xf32>
    %cst_55 = arith.constant dense<0xFF800000> : vector<8xf32>
    %83 = vector.multi_reduction <maximumf>, %80, %cst_55 [1] : vector<8x8xf32> to vector<8xf32>
    %84 = vector.shape_cast %83 : vector<8xf32> to vector<8x1xf32>
    %85 = arith.maximumf %82, %84 : vector<8x1xf32>
    %86 = arith.subf %82, %85 : vector<8x1xf32>
    %87 = math.exp %86 : vector<8x1xf32>
    %88 = vector.broadcast %85 : vector<8x1xf32> to vector<8x8xf32>
    %89 = arith.subf %80, %88 : vector<8x8xf32>
    %90 = math.exp %89 : vector<8x8xf32>
    %c2_56 = arith.constant 2 : index
    %c0_57 = arith.constant 0 : index
    %c0_58 = arith.constant 0 : index
    %91 = vector.load %arg10[%c2_56, %c0_57, %c0_58] : memref<4x8x1xf32, #tpu.memory_space<vmem>>, vector<1x8x1xf32>
    %92 = vector.shape_cast %91 : vector<1x8x1xf32> to vector<8x1xf32>
    %93 = arith.mulf %87, %92 : vector<8x1xf32>
    %cst_59 = arith.constant dense<0.000000e+00> : vector<8xf32>
    %94 = vector.multi_reduction <add>, %90, %cst_59 [1] : vector<8x8xf32> to vector<8xf32>
    %95 = vector.shape_cast %94 : vector<8xf32> to vector<8x1xf32>
    %96 = arith.addf %93, %95 : vector<8x1xf32>
    %c2_60 = arith.constant 2 : index
    %c0_61 = arith.constant 0 : index
    %c0_62 = arith.constant 0 : index
    %97 = vector.load %arg10[%c2_60, %c0_61, %c0_62] : memref<4x8x1xf32, #tpu.memory_space<vmem>>, vector<1x8x1xf32>
    %98 = vector.shape_cast %97 : vector<1x8x1xf32> to vector<8x1xf32>
    %99 = vector.shape_cast %96 : vector<8x1xf32> to vector<1x8x1xf32>
    tpu.vector_store %arg10[%c2_60, %c0_61, %c0_62], %99 {strides = array<i32>} : memref<4x8x1xf32, #tpu.memory_space<vmem>>, vector<1x8x1xf32>,
    %c2_63 = arith.constant 2 : index
    %c0_64 = arith.constant 0 : index
    %c0_65 = arith.constant 0 : index
    %100 = vector.load %arg11[%c2_63, %c0_64, %c0_65] : memref<4x8x8xf32, #tpu.memory_space<vmem>>, vector<1x8x8xf32>
    %101 = vector.shape_cast %100 : vector<1x8x8xf32> to vector<8x8xf32>
    %102 = vector.broadcast %87 : vector<8x1xf32> to vector<8x8xf32>
    %103 = arith.mulf %102, %101 : vector<8x8xf32>
    %cst_66 = arith.constant dense<0.000000e+00> : vector<8x8xf32>
    %104 = tpu.matmul %90, %79, %cst_66 {dimension_numbers = #tpu.dot_dimension_numbers<[1], [0], [0], [1], [0, 0, 1, 1], [], []>} : vector<8x8xf32>, vector<8x8xf32>, vector<8x8xf32> -> vector<8x8xf32>
    %105 = arith.addf %103, %104 : vector<8x8xf32>
    %c2_67 = arith.constant 2 : index
    %c0_68 = arith.constant 0 : index
    %c0_69 = arith.constant 0 : index
    %106 = vector.load %arg11[%c2_67, %c0_68, %c0_69] : memref<4x8x8xf32, #tpu.memory_space<vmem>>, vector<1x8x8xf32>
    %107 = vector.shape_cast %106 : vector<1x8x8xf32> to vector<8x8xf32>
    %108 = vector.shape_cast %105 : vector<8x8xf32> to vector<1x8x8xf32>
    tpu.vector_store %arg11[%c2_67, %c0_68, %c0_69], %108 {strides = array<i32>} : memref<4x8x8xf32, #tpu.memory_space<vmem>>, vector<1x8x8xf32>,
    %c2_70 = arith.constant 2 : index
    %c0_71 = arith.constant 0 : index
    %c0_72 = arith.constant 0 : index
    %109 = vector.load %arg9[%c2_70, %c0_71, %c0_72] : memref<4x8x1xf32, #tpu.memory_space<vmem>>, vector<1x8x1xf32>
    %110 = vector.shape_cast %109 : vector<1x8x1xf32> to vector<8x1xf32>
    %111 = vector.shape_cast %85 : vector<8x1xf32> to vector<1x8x1xf32>
    tpu.vector_store %arg9[%c2_70, %c0_71, %c0_72], %111 {strides = array<i32>} : memref<4x8x1xf32, #tpu.memory_space<vmem>>, vector<1x8x1xf32>,
    %c0_73 = arith.constant 0 : index
    %c24 = arith.constant 24 : index
    %112 = vector.load %arg8[%c0_73, %c24] : memref<8x32xf32, #tpu.memory_space<vmem>>, vector<8x8xf32>
    %113 = vector.extract_strided_slice %4 {offsets = [0, 24], sizes = [8, 8], strides = [1, 1]} : vector<8x32xf32> to vector<8x8xf32>
    %114 = vector.extract_strided_slice %6 {offsets = [0, 24], sizes = [8, 8], strides = [1, 1]} : vector<8x32xf32> to vector<8x8xf32>
    %cst_74 = arith.constant dense<0.000000e+00> : vector<8x8xf32>
    %115 = tpu.matmul %112, %113, %cst_74 {dimension_numbers = #tpu.dot_dimension_numbers<[1], [1], [0], [0], [0, 0, 1, 0], [], []>} : vector<8x8xf32>, vector<8x8xf32>, vector<8x8xf32> -> vector<8x8xf32>
    %c3 = arith.constant 3 : index
    %c0_75 = arith.constant 0 : index
    %c0_76 = arith.constant 0 : index
    %116 = vector.load %arg9[%c3, %c0_75, %c0_76] : memref<4x8x1xf32, #tpu.memory_space<vmem>>, vector<1x8x1xf32>
    %117 = vector.shape_cast %116 : vector<1x8x1xf32> to vector<8x1xf32>
    %cst_77 = arith.constant dense<0xFF800000> : vector<8xf32>
    %118 = vector.multi_reduction <maximumf>, %115, %cst_77 [1] : vector<8x8xf32> to vector<8xf32>
    %119 = vector.shape_cast %118 : vector<8xf32> to vector<8x1xf32>
    %120 = arith.maximumf %117, %119 : vector<8x1xf32>
    %121 = arith.subf %117, %120 : vector<8x1xf32>
    %122 = math.exp %121 : vector<8x1xf32>
    %123 = vector.broadcast %120 : vector<8x1xf32> to vector<8x8xf32>
    %124 = arith.subf %115, %123 : vector<8x8xf32>
    %125 = math.exp %124 : vector<8x8xf32>
    %c3_78 = arith.constant 3 : index
    %c0_79 = arith.constant 0 : index
    %c0_80 = arith.constant 0 : index
    %126 = vector.load %arg10[%c3_78, %c0_79, %c0_80] : memref<4x8x1xf32, #tpu.memory_space<vmem>>, vector<1x8x1xf32>
    %127 = vector.shape_cast %126 : vector<1x8x1xf32> to vector<8x1xf32>
    %128 = arith.mulf %122, %127 : vector<8x1xf32>
    %cst_81 = arith.constant dense<0.000000e+00> : vector<8xf32>
    %129 = vector.multi_reduction <add>, %125, %cst_81 [1] : vector<8x8xf32> to vector<8xf32>
    %130 = vector.shape_cast %129 : vector<8xf32> to vector<8x1xf32>
    %131 = arith.addf %128, %130 : vector<8x1xf32>
    %c3_82 = arith.constant 3 : index
    %c0_83 = arith.constant 0 : index
    %c0_84 = arith.constant 0 : index
    %132 = vector.load %arg10[%c3_82, %c0_83, %c0_84] : memref<4x8x1xf32, #tpu.memory_space<vmem>>, vector<1x8x1xf32>
    %133 = vector.shape_cast %132 : vector<1x8x1xf32> to vector<8x1xf32>
    %134 = vector.shape_cast %131 : vector<8x1xf32> to vector<1x8x1xf32>
    tpu.vector_store %arg10[%c3_82, %c0_83, %c0_84], %134 {strides = array<i32>} : memref<4x8x1xf32, #tpu.memory_space<vmem>>, vector<1x8x1xf32>,
    %c3_85 = arith.constant 3 : index
    %c0_86 = arith.constant 0 : index
    %c0_87 = arith.constant 0 : index
    %135 = vector.load %arg11[%c3_85, %c0_86, %c0_87] : memref<4x8x8xf32, #tpu.memory_space<vmem>>, vector<1x8x8xf32>
    %136 = vector.shape_cast %135 : vector<1x8x8xf32> to vector<8x8xf32>
    %137 = vector.broadcast %122 : vector<8x1xf32> to vector<8x8xf32>
    %138 = arith.mulf %137, %136 : vector<8x8xf32>
    %cst_88 = arith.constant dense<0.000000e+00> : vector<8x8xf32>
    %139 = tpu.matmul %125, %114, %cst_88 {dimension_numbers = #tpu.dot_dimension_numbers<[1], [0], [0], [1], [0, 0, 1, 1], [], []>} : vector<8x8xf32>, vector<8x8xf32>, vector<8x8xf32> -> vector<8x8xf32>
    %140 = arith.addf %138, %139 : vector<8x8xf32>
    %c3_89 = arith.constant 3 : index
    %c0_90 = arith.constant 0 : index
    %c0_91 = arith.constant 0 : index
    %141 = vector.load %arg11[%c3_89, %c0_90, %c0_91] : memref<4x8x8xf32, #tpu.memory_space<vmem>>, vector<1x8x8xf32>
    %142 = vector.shape_cast %141 : vector<1x8x8xf32> to vector<8x8xf32>
    %143 = vector.shape_cast %140 : vector<8x8xf32> to vector<1x8x8xf32>
    tpu.vector_store %arg11[%c3_89, %c0_90, %c0_91], %143 {strides = array<i32>} : memref<4x8x8xf32, #tpu.memory_space<vmem>>, vector<1x8x8xf32>,
    %c3_92 = arith.constant 3 : index
    %c0_93 = arith.constant 0 : index
    %c0_94 = arith.constant 0 : index
    %144 = vector.load %arg9[%c3_92, %c0_93, %c0_94] : memref<4x8x1xf32, #tpu.memory_space<vmem>>, vector<1x8x1xf32>
    %145 = vector.shape_cast %144 : vector<1x8x1xf32> to vector<8x1xf32>
    %146 = vector.shape_cast %120 : vector<8x1xf32> to vector<1x8x1xf32>
    tpu.vector_store %arg9[%c3_92, %c0_93, %c0_94], %146 {strides = array<i32>} : memref<4x8x1xf32, #tpu.memory_space<vmem>>, vector<1x8x1xf32>,
    %c0_i32_95 = arith.constant 0 : i32
    %147 = arith.cmpi eq, %arg3, %c0_i32_95 : i32
    %148 = arith.extui %147 : i1 to i32
    %c0_i32_96 = arith.constant 0 : i32
    %149 = arith.cmpi ne, %148, %c0_i32_96 : i32
    scf.if %149 {
      %c0_97 = arith.constant 0 : index
      %c0_98 = arith.constant 0 : index
      %c0_99 = arith.constant 0 : index
      %150 = vector.load %arg10[%c0_97, %c0_98, %c0_99] : memref<4x8x1xf32, #tpu.memory_space<vmem>>, vector<1x8x1xf32>
      %151 = vector.shape_cast %150 : vector<1x8x1xf32> to vector<8x1xf32>
      %152 = tpu.reciprocal %151 {approx = true} : vector<8x1xf32> -> vector<8x1xf32>
      %c0_100 = arith.constant 0 : index
      %c0_101 = arith.constant 0 : index
      %c0_102 = arith.constant 0 : index
      %153 = vector.load %arg11[%c0_100, %c0_101, %c0_102] : memref<4x8x8xf32, #tpu.memory_space<vmem>>, vector<1x8x8xf32>
      %154 = vector.shape_cast %153 : vector<1x8x8xf32> to vector<8x8xf32>
      %155 = vector.broadcast %152 : vector<8x1xf32> to vector<8x8xf32>
      %156 = arith.mulf %154, %155 : vector<8x8xf32>
      %c0_103 = arith.constant 0 : index
      %c0_104 = arith.constant 0 : index
      %c0_105 = arith.constant 0 : index
      %157 = vector.load %arg7[%c0_103, %c0_104, %c0_105] : memref<1x8x32xf32, #tpu.memory_space<vmem>>, vector<1x8x8xf32>
      %158 = vector.shape_cast %157 : vector<1x8x8xf32> to vector<8x8xf32>
      %159 = vector.shape_cast %156 : vector<8x8xf32> to vector<1x8x8xf32>
      tpu.vector_store %arg7[%c0_103, %c0_104, %c0_105], %159 {strides = array<i32>} : memref<1x8x32xf32, #tpu.memory_space<vmem>>, vector<1x8x8xf32>,
      %c1_106 = arith.constant 1 : index
      %c0_107 = arith.constant 0 : index
      %c0_108 = arith.constant 0 : index
      %160 = vector.load %arg10[%c1_106, %c0_107, %c0_108] : memref<4x8x1xf32, #tpu.memory_space<vmem>>, vector<1x8x1xf32>
      %161 = vector.shape_cast %160 : vector<1x8x1xf32> to vector<8x1xf32>
      %162 = tpu.reciprocal %161 {approx = true} : vector<8x1xf32> -> vector<8x1xf32>
      %c1_109 = arith.constant 1 : index
      %c0_110 = arith.constant 0 : index
      %c0_111 = arith.constant 0 : index
      %163 = vector.load %arg11[%c1_109, %c0_110, %c0_111] : memref<4x8x8xf32, #tpu.memory_space<vmem>>, vector<1x8x8xf32>
      %164 = vector.shape_cast %163 : vector<1x8x8xf32> to vector<8x8xf32>
      %165 = vector.broadcast %162 : vector<8x1xf32> to vector<8x8xf32>
      %166 = arith.mulf %164, %165 : vector<8x8xf32>
      %c0_112 = arith.constant 0 : index
      %c0_113 = arith.constant 0 : index
      %c8_114 = arith.constant 8 : index
      %167 = vector.load %arg7[%c0_112, %c0_113, %c8_114] : memref<1x8x32xf32, #tpu.memory_space<vmem>>, vector<1x8x8xf32>
      %168 = vector.shape_cast %167 : vector<1x8x8xf32> to vector<8x8xf32>
      %169 = vector.shape_cast %166 : vector<8x8xf32> to vector<1x8x8xf32>
      tpu.vector_store %arg7[%c0_112, %c0_113, %c8_114], %169 {strides = array<i32>} : memref<1x8x32xf32, #tpu.memory_space<vmem>>, vector<1x8x8xf32>,
      %c2_115 = arith.constant 2 : index
      %c0_116 = arith.constant 0 : index
      %c0_117 = arith.constant 0 : index
      %170 = vector.load %arg10[%c2_115, %c0_116, %c0_117] : memref<4x8x1xf32, #tpu.memory_space<vmem>>, vector<1x8x1xf32>
      %171 = vector.shape_cast %170 : vector<1x8x1xf32> to vector<8x1xf32>
      %172 = tpu.reciprocal %171 {approx = true} : vector<8x1xf32> -> vector<8x1xf32>
      %c2_118 = arith.constant 2 : index
      %c0_119 = arith.constant 0 : index
      %c0_120 = arith.constant 0 : index
      %173 = vector.load %arg11[%c2_118, %c0_119, %c0_120] : memref<4x8x8xf32, #tpu.memory_space<vmem>>, vector<1x8x8xf32>
      %174 = vector.shape_cast %173 : vector<1x8x8xf32> to vector<8x8xf32>
      %175 = vector.broadcast %172 : vector<8x1xf32> to vector<8x8xf32>
      %176 = arith.mulf %174, %175 : vector<8x8xf32>
      %c0_121 = arith.constant 0 : index
      %c0_122 = arith.constant 0 : index
      %c16_123 = arith.constant 16 : index
      %177 = vector.load %arg7[%c0_121, %c0_122, %c16_123] : memref<1x8x32xf32, #tpu.memory_space<vmem>>, vector<1x8x8xf32>
      %178 = vector.shape_cast %177 : vector<1x8x8xf32> to vector<8x8xf32>
      %179 = vector.shape_cast %176 : vector<8x8xf32> to vector<1x8x8xf32>
      tpu.vector_store %arg7[%c0_121, %c0_122, %c16_123], %179 {strides = array<i32>} : memref<1x8x32xf32, #tpu.memory_space<vmem>>, vector<1x8x8xf32>,
      %c3_124 = arith.constant 3 : index
      %c0_125 = arith.constant 0 : index
      %c0_126 = arith.constant 0 : index
      %180 = vector.load %arg10[%c3_124, %c0_125, %c0_126] : memref<4x8x1xf32, #tpu.memory_space<vmem>>, vector<1x8x1xf32>
      %181 = vector.shape_cast %180 : vector<1x8x1xf32> to vector<8x1xf32>
      %182 = tpu.reciprocal %181 {approx = true} : vector<8x1xf32> -> vector<8x1xf32>
      %c3_127 = arith.constant 3 : index
      %c0_128 = arith.constant 0 : index
      %c0_129 = arith.constant 0 : index
      %183 = vector.load %arg11[%c3_127, %c0_128, %c0_129] : memref<4x8x8xf32, #tpu.memory_space<vmem>>, vector<1x8x8xf32>
      %184 = vector.shape_cast %183 : vector<1x8x8xf32> to vector<8x8xf32>
      %185 = vector.broadcast %182 : vector<8x1xf32> to vector<8x8xf32>
      %186 = arith.mulf %184, %185 : vector<8x8xf32>
      %c0_130 = arith.constant 0 : index
      %c0_131 = arith.constant 0 : index
      %c24_132 = arith.constant 24 : index
      %187 = vector.load %arg7[%c0_130, %c0_131, %c24_132] : memref<1x8x32xf32, #tpu.memory_space<vmem>>, vector<1x8x8xf32>
      %188 = vector.shape_cast %187 : vector<1x8x8xf32> to vector<8x8xf32>
      %189 = vector.shape_cast %186 : vector<8x8xf32> to vector<1x8x8xf32>
      tpu.vector_store %arg7[%c0_130, %c0_131, %c24_132], %189 {strides = array<i32>} : memref<1x8x32xf32, #tpu.memory_space<vmem>>, vector<1x8x8xf32>,
    } else {
    }
    return
  }
  func.func @transform_0(%arg0: i32, %arg1: i32, %arg2: i32, %arg3: i32) -> (i32, i32, i32) {
    %c0_i32 = arith.constant 0 : i32
    return %arg0, %arg2, %arg1 : i32, i32, i32
  }
  func.func @transform_1(%arg0: i32, %arg1: i32, %arg2: i32, %arg3: i32) -> (i32, i32, i32) {
    %c0_i32 = arith.constant 0 : i32
    return %arg0, %arg3, %arg1 : i32, i32, i32
  }
  func.func @transform_2(%arg0: i32, %arg1: i32, %arg2: i32, %arg3: i32) -> (i32, i32, i32) {
    %c0_i32 = arith.constant 0 : i32
    return %arg0, %arg3, %arg1 : i32, i32, i32
  }
  func.func @transform_3(%arg0: i32, %arg1: i32, %arg2: i32, %arg3: i32) -> (i32, i32, i32) {
    %c0_i32 = arith.constant 0 : i32
    return %arg0, %arg2, %arg1 : i32, i32, i32
  }
}

</mosaic_0001>

<llo_original>
// kernel: tpu_custom_call.1
$region0: #{tpu_custom_call.1}
  #allocation0 [shape = 'u32[]', space=smem, size = 0x4, offset = 0x4, fixed_abs, tag = 'smem constant byte address 0x4 - core index']
  #allocation1 [shape = 'u32[144,128]{1,0:T(1,128)}', space=vmem, size = 0x12000, scoped, tag = 'internal scratch']
  #allocation2 [shape = 'f32[8,32]{1,0:T(8,128)}', space=vmem, size = 0x1000, scoped, tag = 'scratch operand']
  #allocation3 [shape = 'f32[4,8,1]{2,1,0:T(8,128)}', space=vmem, size = 0x4000, scoped, tag = 'scratch operand']
  #allocation4 [shape = 'f32[4,8,1]{2,1,0:T(8,128)}', space=vmem, size = 0x4000, scoped, tag = 'scratch operand']
  #allocation5 [shape = 'f32[4,8,8]{2,1,0:T(8,128)}', space=vmem, size = 0x4000, scoped, tag = 'scratch operand']
  %s0 = inlined_call_operand.hbm [shape: f32[2,8,32], index: 0, kind: input, shape index: {}]
  %s1 = inlined_call_operand.hbm [shape: f32[2,8,32], index: 1, kind: input, shape index: {}]
  %s2 = inlined_call_operand.hbm [shape: f32[2,8,32], index: 2, kind: input, shape index: {}]
  %s3 = inlined_call_operand.hbm [shape: f32[2,8,32], index: 3, kind: output, shape index: {}]
  %s4 = sld [smem:[#allocation0]]
  $region65: #{tpu_custom_call.1} parent=0
    _
  %s6 = ssub.s32 1, %s4
  %s7 = scalar_select 0, %s6, %s4
  $region1: #{tpu_custom_call.1} parent=0
    #allocation6 [shape = 'u8[8192]{0}', space=vmem, size = 0x2000, scoped, tag = 'input window, operand 0']
    #allocation7 [shape = 's32[2]{0}', space=sflag, size = 0x8, scoped, tag = 'scoped memory for tpu_custom_call.1']
    #allocation8 [shape = 's32[2]{0}', space=sflag, size = 0x8, scoped, tag = 'scoped memory for tpu_custom_call.1']
    #allocation9 [shape = 'u8[8192]{0}', space=vmem, size = 0x2000, scoped, tag = 'input window, operand 1']
    #allocation10 [shape = 's32[2]{0}', space=sflag, size = 0x8, scoped, tag = 'scoped memory for tpu_custom_call.1']
    #allocation11 [shape = 'u8[8192]{0}', space=vmem, size = 0x2000, scoped, tag = 'input window, operand 2']
    #allocation12 [shape = 'u8[8192]{0}', space=vmem, size = 0x2000, scoped, tag = 'output window, operand 0']
    %8 = vsyncpa [#allocation7], 0
    %s9 = scalar_lea.sflag [#allocation7], 1
    %10 = vsyncpa %s9, 0
    %11 = vsyncpa [#allocation10], 0
    %s12 = scalar_lea.sflag [#allocation10], 1
    %13 = vsyncpa %s12, 0
    %14 = vsyncpa [#allocation8], 0
    %s15 = scalar_lea.sflag [#allocation8], 1
    %16 = vsyncpa %s15, 0
    loop: start=0, step=1, limit=4
    $region2: #{tpu_custom_call.1} parent=1 // loop_pre_header
      _
    $region3: #{tpu_custom_call.1} parent=1 // loop_header
      %s18 = sphi 0, %s22
      %p19 = scmp.ge.s32.totalorder %s18, 4
      %s25 = sphi 0, %s51
      %s26 = sphi 0, %s47
      %s27 = sphi 0, %s43
      %s28 = sphi 0, %s39
      %s29 = sphi 0, %s25
      %s30 = sphi 0, %s26
      %s31 = sphi 0, %s27
      %s32 = sphi 0, %s28
      %s33 = sphi 0, %s29
      %s34 = sphi 0, %s30
      %s35 = sphi 0, %s31
      %s36 = sphi 0, %s32
      %s58 = sphi 0, %s60
      %s61 = sphi 0, %s58
      %s62 = sphi 0, %s61
      %s78 = sphi 0, %s62
      %s88 = sphi 0, %s90
      %s91 = sphi 0, %s88
      %s92 = sphi 0, %s91
      %s108 = sphi 0, %s92
      %s118 = sphi 0, %s120
      %s121 = sphi 0, %s118
      %s122 = sphi 0, %s121
      %s138 = sphi 0, %s122
      %s148 = sphi 0, %s150
      %s151 = sphi 0, %s148
      %s152 = sphi 0, %s151
      %s168 = sphi 0, %s152
    $region4: #{tpu_custom_call.1} parent=1 // loop_header_branch
      %21 = sbr.rel (%p19) target = $region8
    $region5: #{tpu_custom_call.1} parent=1 // loop_body
      %s23 = ssub.s32 %s18, 1
      %s24 = ssub.s32 %s18, 2
      %s37 = sadd.s32 1, %s28
      %p38 = scmp.ge.s32.totalorder %s37, 1
      %s39 = scalar_select %p38, 0, %s37
      %s40 = sadd.s32 1, %s27
      %s41 = scalar_select %p38, %s40, %s27
      %p42 = scmp.ge.s32.totalorder %s41, 1
      %s43 = scalar_select %p42, 0, %s41
      %s44 = sadd.s32 1, %s26
      %s45 = scalar_select %p42, %s44, %s26
      %p46 = scmp.ge.s32.totalorder %s45, 1
      %s47 = scalar_select %p46, 0, %s45
      %s48 = sadd.s32 1, %s25
      %s49 = scalar_select %p46, %s48, %s25
      %p50 = scmp.ge.s32.totalorder %s49, 2
      %s51 = scalar_select %p50, 0, %s49
      %s52 = ssub.s32 %s25, %s51
      %s53 = ssub.s32 %s27, %s43
      %s54 = sor.u32 %s52, %s53
      %s55 = ssub.s32 %s26, %s47
      %s56 = sor.u32 %s54, %s55
      %p57 = scmp.eq.s32.totalorder %s56, 0
      %s59 = sadd.s32 %s58, 1
      %s60 = scalar_select %p57, %s58, %s59
      %p63 = pneg %p57
      %p64 = scmp.eq.s32.totalorder %s18, 1
      %p65 = por %p63, %p64
      %p66 = scmp.ne.s32.totalorder %s58, %s61
      %p67 = scmp.eq.s32.totalorder %s18, 0
      %p68 = por %p66, %p67
      %p69 = scmp.ne.s32.totalorder %s58, %s61
      %p70 = scmp.eq.s32.totalorder %s23, 1
      %p71 = por %p69, %p70
      %p72 = scmp.ne.s32.totalorder %s61, %s62
      %p73 = scmp.eq.s32.totalorder %s23, 0
      %p74 = por %p72, %p73
      %p75 = scmp.ne.s32.totalorder %s61, %s62
      %p76 = scmp.eq.s32.totalorder %s24, 1
      %p77 = por %p75, %p76
      %p79 = scmp.ne.s32.totalorder %s62, %s78
      %p80 = scmp.eq.s32.totalorder %s24, 0
      %p81 = por %p79, %p80
      %s82 = ssub.s32 %s25, %s51
      %s83 = ssub.s32 %s28, %s39
      %s84 = sor.u32 %s82, %s83
      %s85 = ssub.s32 %s26, %s47
      %s86 = sor.u32 %s84, %s85
      %p87 = scmp.eq.s32.totalorder %s86, 0
      %s89 = sadd.s32 %s88, 1
      %s90 = scalar_select %p87, %s88, %s89
      %p93 = pneg %p87
      %p94 = scmp.eq.s32.totalorder %s18, 1
      %p95 = por %p93, %p94
      %p96 = scmp.ne.s32.totalorder %s88, %s91
      %p97 = scmp.eq.s32.totalorder %s18, 0
      %p98 = por %p96, %p97
      %p99 = scmp.ne.s32.totalorder %s88, %s91
      %p100 = scmp.eq.s32.totalorder %s23, 1
      %p101 = por %p99, %p100
      %p102 = scmp.ne.s32.totalorder %s91, %s92
      %p103 = scmp.eq.s32.totalorder %s23, 0
      %p104 = por %p102, %p103
      %p105 = scmp.ne.s32.totalorder %s91, %s92
      %p106 = scmp.eq.s32.totalorder %s24, 1
      %p107 = por %p105, %p106
      %p109 = scmp.ne.s32.totalorder %s92, %s108
      %p110 = scmp.eq.s32.totalorder %s24, 0
      %p111 = por %p109, %p110
      %s112 = ssub.s32 %s25, %s51
      %s113 = ssub.s32 %s28, %s39
      %s114 = sor.u32 %s112, %s113
      %s115 = ssub.s32 %s26, %s47
      %s116 = sor.u32 %s114, %s115
      %p117 = scmp.eq.s32.totalorder %s116, 0
      %s119 = sadd.s32 %s118, 1
      %s120 = scalar_select %p117, %s118, %s119
      %p123 = pneg %p117
      %p124 = scmp.eq.s32.totalorder %s18, 1
      %p125 = por %p123, %p124
      %p126 = scmp.ne.s32.totalorder %s118, %s121
      %p127 = scmp.eq.s32.totalorder %s18, 0
      %p128 = por %p126, %p127
      %p129 = scmp.ne.s32.totalorder %s118, %s121
      %p130 = scmp.eq.s32.totalorder %s23, 1
      %p131 = por %p129, %p130
      %p132 = scmp.ne.s32.totalorder %s121, %s122
      %p133 = scmp.eq.s32.totalorder %s23, 0
      %p134 = por %p132, %p133
      %p135 = scmp.ne.s32.totalorder %s121, %s122
      %p136 = scmp.eq.s32.totalorder %s24, 1
      %p137 = por %p135, %p136
      %p139 = scmp.ne.s32.totalorder %s122, %s138
      %p140 = scmp.eq.s32.totalorder %s24, 0
      %p141 = por %p139, %p140
      %s142 = ssub.s32 %s25, %s51
      %s143 = ssub.s32 %s27, %s43
      %s144 = sor.u32 %s142, %s143
      %s145 = ssub.s32 %s26, %s47
      %s146 = sor.u32 %s144, %s145
      %p147 = scmp.eq.s32.totalorder %s146, 0
      %s149 = sadd.s32 %s148, 1
      %s150 = scalar_select %p147, %s148, %s149
      %p153 = pneg %p147
      %p154 = scmp.eq.s32.totalorder %s18, 1
      %p155 = por %p153, %p154
      %p156 = scmp.ne.s32.totalorder %s148, %s151
      %p157 = scmp.eq.s32.totalorder %s18, 0
      %p158 = por %p156, %p157
      %p159 = scmp.ne.s32.totalorder %s148, %s151
      %p160 = scmp.eq.s32.totalorder %s23, 1
      %p161 = por %p159, %p160
      %p162 = scmp.ne.s32.totalorder %s151, %s152
      %p163 = scmp.eq.s32.totalorder %s23, 0
      %p164 = por %p162, %p163
      %p165 = scmp.ne.s32.totalorder %s151, %s152
      %p166 = scmp.eq.s32.totalorder %s24, 1
      %p167 = por %p165, %p166
      %p169 = scmp.ne.s32.totalorder %s152, %s168
      %p170 = scmp.eq.s32.totalorder %s24, 0
      %p171 = por %p169, %p170
      %p172 = scmp.le.s32.totalorder 1, %s18
      %p173 = scmp.lt.s32.totalorder %s18, 3
      %p174 = pnand %p172, %p173
      %p175 = pneg %p174
      // Predicated region
      $region9: #{tpu_custom_call.1} parent=5 // pred_check
        _
      $region10: #{tpu_custom_call.1} parent=5 // pred_check_branch
        %177 = sbr.rel (%p174) target = $region12
      $region11: #{tpu_custom_call.1} parent=5 // pred_region
        %s178 = ssub.s32 %s18, 1
      $region12: #{tpu_custom_call.1} parent=5 // pred_fallthru
        _
      %p179 = scmp.lt.s32.totalorder %s18, 2
      // Predicated region
      $region13: #{tpu_custom_call.1} parent=5 // pred_check
        %p180 = pneg %p179
      $region14: #{tpu_custom_call.1} parent=5 // pred_check_branch
        %182 = sbr.rel (%p180) target = $region16
      $region15: #{tpu_custom_call.1} parent=5 // pred_region
        // Predicated region
        $region17: #{tpu_custom_call.1} parent=15 // pred_check
          %p183 = pneg %p68
        $region18: #{tpu_custom_call.1} parent=15 // pred_check_branch
          %185 = sbr.rel (%p183) target = $region20
        $region19: #{tpu_custom_call.1} parent=15 // pred_region
          %s186 = sand.u32 %s58, 1
          %s187 = scalar_lea.sflag [#allocation7], %s186
          %s188 = sand.u32 %s58, 1
          %s189 = smul.addr %s188, 8
          %s190 = scalar_lea.vmem [#allocation6], %s189
          %s192 = ssub.s32 128, 128
          %193 = vsyncadd %s187, %s192
          %s194 = sadd.s32 %s26, %s27
          %s195 = sadd.s32 %s194, %s25
          %s196 = smul.addr %s195, 128
          %s197 = scalar_lea.hbm %s0, %s196
          %s199 = sshll.u32 %s190, 4
          %s200 = int_to_ptr.vmem [resolvable:$true] %s199
          %202 = dma.hbm_to_vmem [thread:$0]  %s197, 128, %s200, %s187
        $region20: #{tpu_custom_call.1} parent=15 // pred_fallthru
          _
        // Predicated region
        $region21: #{tpu_custom_call.1} parent=15 // pred_check
          %p203 = pneg %p98
        $region22: #{tpu_custom_call.1} parent=15 // pred_check_branch
          %205 = sbr.rel (%p203) target = $region24
        $region23: #{tpu_custom_call.1} parent=15 // pred_region
          %s206 = sand.u32 %s18, 1
          %s207 = scalar_lea.sflag [#allocation10], %s206
          %s208 = sand.u32 %s88, 1
          %s209 = smul.addr %s208, 8
          %s210 = scalar_lea.vmem [#allocation9], %s209
          %s212 = ssub.s32 128, 128
          %213 = vsyncadd %s207, %s212
          %s214 = sadd.s32 %s26, %s28
          %s215 = sadd.s32 %s214, %s25
          %s216 = smul.addr %s215, 128
          %s217 = scalar_lea.hbm %s1, %s216
          %s219 = sshll.u32 %s210, 4
          %s220 = int_to_ptr.vmem [resolvable:$true] %s219
          %222 = dma.hbm_to_vmem [thread:$0]  %s217, 128, %s220, %s207
        $region24: #{tpu_custom_call.1} parent=15 // pred_fallthru
          _
        // Predicated region
        $region25: #{tpu_custom_call.1} parent=15 // pred_check
          %p223 = pneg %p128
        $region26: #{tpu_custom_call.1} parent=15 // pred_check_branch
          %225 = sbr.rel (%p223) target = $region28
        $region27: #{tpu_custom_call.1} parent=15 // pred_region
          %s226 = sand.u32 %s18, 1
          %s227 = scalar_lea.sflag [#allocation10], %s226
          %s228 = sand.u32 %s118, 1
          %s229 = smul.addr %s228, 8
          %s230 = scalar_lea.vmem [#allocation11], %s229
          %s232 = ssub.s32 128, 128
          %233 = vsyncadd %s227, %s232
          %s234 = sadd.s32 %s26, %s28
          %s235 = sadd.s32 %s234, %s25
          %s236 = smul.addr %s235, 128
          %s237 = scalar_lea.hbm %s2, %s236
          %s239 = sshll.u32 %s230, 4
          %s240 = int_to_ptr.vmem [resolvable:$true] %s239
          %242 = dma.hbm_to_vmem [thread:$0]  %s237, 128, %s240, %s227
        $region28: #{tpu_custom_call.1} parent=15 // pred_fallthru
          _
      $region16: #{tpu_custom_call.1} parent=5 // pred_fallthru
        _
      %p243 = scmp.le.s32.totalorder 1, %s18
      %p244 = scmp.lt.s32.totalorder %s18, 3
      %p245 = pnand %p243, %p244
      %p246 = pneg %p245
      // Predicated region
      $region29: #{tpu_custom_call.1} parent=5 // pred_check
        _
      $region30: #{tpu_custom_call.1} parent=5 // pred_check_branch
        %248 = sbr.rel (%p245) target = $region32
      $region31: #{tpu_custom_call.1} parent=5 // pred_region
        %s249 = ssub.s32 %s18, 1
        %s250 = sand.u32 %s61, 1
        %s251 = scalar_lea.sflag [#allocation7], %s250
        %s252 = sand.u32 %s61, 1
        %s253 = smul.addr %s252, 8
        %s254 = scalar_lea.vmem [#allocation6], %s253
        // Predicated region
        $region33: #{tpu_custom_call.1} parent=31 // pred_check
          %p255 = pneg %p74
        $region34: #{tpu_custom_call.1} parent=31 // pred_check_branch
          %257 = sbr.rel (%p255) target = $region36
        $region35: #{tpu_custom_call.1} parent=31 // pred_region
          %258 = dma.done %s251, 128
        $region36: #{tpu_custom_call.1} parent=31 // pred_fallthru
          _
        %s259 = sand.u32 %s23, 1
        %s260 = scalar_lea.sflag [#allocation10], %s259
        %s261 = sand.u32 %s91, 1
        %s262 = smul.addr %s261, 8
        %s263 = scalar_lea.vmem [#allocation9], %s262
        // Predicated region
        $region37: #{tpu_custom_call.1} parent=31 // pred_check
          %p264 = pneg %p104
        $region38: #{tpu_custom_call.1} parent=31 // pred_check_branch
          %266 = sbr.rel (%p264) target = $region40
        $region39: #{tpu_custom_call.1} parent=31 // pred_region
          %267 = dma.done %s260, 128
        $region40: #{tpu_custom_call.1} parent=31 // pred_fallthru
          _
        %s268 = sand.u32 %s23, 1
        %s269 = scalar_lea.sflag [#allocation10], %s268
        %s270 = sand.u32 %s121, 1
        %s271 = smul.addr %s270, 8
        %s272 = scalar_lea.vmem [#allocation11], %s271
        // Predicated region
        $region41: #{tpu_custom_call.1} parent=31 // pred_check
          %p273 = pneg %p134
        $region42: #{tpu_custom_call.1} parent=31 // pred_check_branch
          %275 = sbr.rel (%p273) target = $region44
        $region43: #{tpu_custom_call.1} parent=31 // pred_region
          %276 = dma.done %s269, 128
        $region44: #{tpu_custom_call.1} parent=31 // pred_fallthru
          _
        %s277 = sand.u32 %s61, 1
        %s278 = scalar_lea.sflag [#allocation7], %s277
        %s279 = sand.u32 %s61, 1
        %s280 = smul.addr %s279, 8
        %s281 = scalar_lea.vmem [#allocation6], %s280
        %p282 = pneg %p74
        %p283 = pneg %p71
        %s284 = sand.u32 %s23, 1
        %s285 = scalar_lea.sflag [#allocation10], %s284
        %s286 = sand.u32 %s91, 1
        %s287 = smul.addr %s286, 8
        %s288 = scalar_lea.vmem [#allocation9], %s287
        %p289 = pneg %p104
        %p290 = pneg %p101
        %s291 = sand.u32 %s23, 1
        %s292 = scalar_lea.sflag [#allocation10], %s291
        %s293 = sand.u32 %s121, 1
        %s294 = smul.addr %s293, 8
        %s295 = scalar_lea.vmem [#allocation11], %s294
        %p296 = pneg %p134
        %p297 = pneg %p131
        %p298 = pneg %p164
        %p299 = pneg %p161
        %s300 = sand.u32 %s151, 1
        %s301 = scalar_lea.sflag [#allocation8], %s300
        %s302 = sand.u32 %s151, 1
        %s303 = smul.addr %s302, 8
        %s304 = scalar_lea.vmem [#allocation12], %s303
        %p305 = scmp.eq.s32.totalorder %s32, 0
        // Predicated region
        $region45: #{tpu_custom_call.1} parent=31 // pred_check
          %p306 = pneg %p305
        $region46: #{tpu_custom_call.1} parent=31 // pred_check_branch
          %308 = sbr.rel (%p306) target = $region48
        $region47: #{tpu_custom_call.1} parent=31 // pred_region
          %v309 = vld [vmem:[%s254] sm:$0xff]
          %v310 = vmul.f32 %v309, 0.35355338
          %vm311 = vcmask 261120
          %312 = vst.msk [vmem:[#allocation2] sm:$0xff] %vm311, %v310
          %vm313 = vcmask 7168
          %314 = vst.msk [vmem:[#allocation3] sm:$0xff] %vm313, -inf
          %315 = vst.msk [vmem:[#allocation3 + $0x8] sm:$0xff] %vm313, -inf
          %316 = vst.msk [vmem:[#allocation3 + $0x10] sm:$0xff] %vm313, -inf
          %317 = vst.msk [vmem:[#allocation3 + $0x18] sm:$0xff] %vm313, -inf
          %318 = vst.msk [vmem:[#allocation4] sm:$0xff] %vm313, 0.0
          %319 = vst.msk [vmem:[#allocation4 + $0x8] sm:$0xff] %vm313, 0.0
          %320 = vst.msk [vmem:[#allocation4 + $0x10] sm:$0xff] %vm313, 0.0
          %321 = vst.msk [vmem:[#allocation4 + $0x18] sm:$0xff] %vm313, 0.0
          %vm322 = vcmask 64512
          %323 = vst.msk [vmem:[#allocation5] sm:$0xff] %vm322, 0.0
          %324 = vst.msk [vmem:[#allocation5 + $0x8] sm:$0xff] %vm322, 0.0
          %325 = vst.msk [vmem:[#allocation5 + $0x10] sm:$0xff] %vm322, 0.0
          %326 = vst.msk [vmem:[#allocation5 + $0x18] sm:$0xff] %vm322, 0.0
        $region48: #{tpu_custom_call.1} parent=31 // pred_fallthru
          _
        %v327 = vld [vmem:[%s263] sm:$0xff]
        %v328 = vld [vmem:[%s272] sm:$0xff]
        %v329 = vld [vmem:[#allocation2] sm:$0xff]
        %vm330 = vcmask 64512
        %v332 = vsel %vm330, %v329, 0
        %v335 = vsel %vm330, %v327, 0
        %337 = vmatprep.subr.mxu0 0.0
        %338 = vmatpush1.xpose.msra.mxu0 %v335
        %339 = vmatprep.subr.mxu0 0.0
        %340 = vmatpush1.xpose.msra.mxu0 0.0
        %341 = vmatprep.subr.mxu0 0.0
        %342 = vmatpush1.xpose.msra.mxu0 0.0
        %343 = vmatprep.subr.mxu0 0.0
        %344 = vmatpush1.xpose.msra.mxu0 0.0
        %345 = vmatprep.subr.mxu0 0.0
        %346 = vmatpush1.xpose.msra.mxu0 0.0
        %347 = vmatprep.subr.mxu0 0.0
        %348 = vmatpush1.xpose.msra.mxu0 0.0
        %349 = vmatprep.subr.mxu0 0.0
        %350 = vmatpush1.xpose.msra.mxu0 0.0
        %351 = vmatprep.subr.mxu0 0.0
        %352 = vmatpush1.xpose.msra.mxu0 0.0
        %353 = vmatprep.subr.mxu0 0.0
        %354 = vmatpush1.xpose.msra.mxu0 0.0
        %355 = vmatprep.subr.mxu0 0.0
        %356 = vmatpush1.xpose.msra.mxu0 0.0
        %357 = vmatprep.subr.mxu0 0.0
        %358 = vmatpush1.xpose.msra.mxu0 0.0
        %359 = vmatprep.subr.mxu0 0.0
        %360 = vmatpush1.xpose.msra.mxu0 0.0
        %361 = vmatprep.subr.mxu0 0.0
        %362 = vmatpush1.xpose.msra.mxu0 0.0
        %363 = vmatprep.subr.mxu0 0.0
        %364 = vmatpush1.xpose.msra.mxu0 0.0
        %365 = vmatprep.subr.mxu0 0.0
        %366 = vmatpush1.xpose.msra.mxu0 0.0
        %367 = vmatprep.subr.mxu0 0.0
        %368 = vmatpush1.xpose.msra.mxu0 0.0
        %369 = vmatprep.subr.mxu0 0.0
        %370 = vmatpush1.xpose.msra.mxu0 0.0
        %371 = vmatprep.subr.mxu0 0.0
        %372 = vmatpush1.xpose.msra.mxu0 0.0
        %373 = vmatprep.subr.mxu0 0.0
        %374 = vmatpush1.xpose.msra.mxu0 0.0
        %375 = vmatprep.subr.mxu0 0.0
        %376 = vmatpush1.xpose.msra.mxu0 0.0
        %377 = vmatprep.subr.mxu0 0.0
        %378 = vmatpush1.xpose.msra.mxu0 0.0
        %379 = vmatprep.subr.mxu0 0.0
        %380 = vmatpush1.xpose.msra.mxu0 0.0
        %381 = vmatprep.subr.mxu0 0.0
        %382 = vmatpush1.xpose.msra.mxu0 0.0
        %383 = vmatprep.subr.mxu0 0.0
        %384 = vmatpush1.xpose.msra.mxu0 0.0
        %385 = vmatprep.subr.mxu0 0.0
        %386 = vmatpush1.xpose.msra.mxu0 0.0
        %387 = vmatprep.subr.mxu0 0.0
        %388 = vmatpush1.xpose.msra.mxu0 0.0
        %389 = vmatprep.subr.mxu0 0.0
        %390 = vmatpush1.xpose.msra.mxu0 0.0
        %391 = vmatprep.subr.mxu0 0.0
        %392 = vmatpush1.xpose.msra.mxu0 0.0
        %393 = vmatprep.subr.mxu0 0.0
        %394 = vmatpush1.xpose.msra.mxu0 0.0
        %395 = vmatprep.subr.mxu0 0.0
        %396 = vmatpush1.xpose.msra.mxu0 0.0
        %397 = vmatprep.subr.mxu0 0.0
        %398 = vmatpush1.xpose.msra.mxu0 0.0
        %399 = vmatprep.subr.mxu0 0.0
        %400 = vmatpush1.xpose.msra.mxu0 0.0
        %401 = vmatprep.mubr.f32.mxu0 0.0
        %402 = vmatmul.mubr.f32.gmra.mrb[0].mxu0 %v332
        %v403 = vpop.f32.mrb[0].mxu0
        %v404 = vadd.f32 0.0, %v403
        %v405 = vpop.f32.mrb[0].mxu0
        %406 = vdwg.mxu0
        %v407 = vld [vmem:[#allocation3] sm:$0xff]
        %v408 = vsel %vm330, %v404, -inf
        %409 = vmax.xlane.f32.xlu0 %v408
        %v410 = vpop.xlane.xlu0 %409
        %v411 = vmax.f32 %v407, %v410
        %v412 = vsub.f32 %v407, %v411
        %v413 = vmul.f32 %v412, 1.442695
        %v414 = vpow.pop %v413
        %416 = vset.pattern.permute.xlu0 0
        %417 = vperm.xlu0 %416, %v411
        %v418 = vpop.permute.xlu0 %417
        %v420 = vsub.f32 %v404, %v418
        %v421 = vmul.f32 %v420, 1.442695
        %v422 = vpow.pop %v421
        %v423 = vld [vmem:[#allocation4] sm:$0xff]
        %v424 = vmul.f32 %v414, %v423
        %v425 = vsel %vm330, %v422, 0.0
        %426 = vadd.xlane.f32.xlu0 %v425
        %v427 = vpop.xlane.xlu0 %426
        %v428 = vadd.f32 %v424, %v427
        %vm429 = vcmask 7168
        %430 = vst.msk [vmem:[#allocation4] sm:$0xff] %vm429, %v428
        %v431 = vld [vmem:[#allocation5] sm:$0xff]
        %433 = vset.pattern.permute.xlu0 0
        %434 = vperm.xlu0 %433, %v414
        %v435 = vpop.permute.xlu0 %434
        %v437 = vmul.f32 %v435, %v431
        %v439 = vsel %vm330, %v422, 0
        %441 = vmatprep.subr.mxu0 0.0
        %442 = vmatpush1.msra.mxu0 %v328
        %443 = vmatprep.subr.mxu0 0.0
        %444 = vmatpush1.msra.mxu0 0.0
        %445 = vmatprep.subr.mxu0 0.0
        %446 = vmatpush1.msra.mxu0 0.0
        %447 = vmatprep.subr.mxu0 0.0
        %448 = vmatpush1.msra.mxu0 0.0
        %449 = vmatprep.subr.mxu0 0.0
        %450 = vmatpush1.msra.mxu0 0.0
        %451 = vmatprep.subr.mxu0 0.0
        %452 = vmatpush1.msra.mxu0 0.0
        %453 = vmatprep.subr.mxu0 0.0
        %454 = vmatpush1.msra.mxu0 0.0
        %455 = vmatprep.subr.mxu0 0.0
        %456 = vmatpush1.msra.mxu0 0.0
        %457 = vmatprep.subr.mxu0 0.0
        %458 = vmatpush1.msra.mxu0 0.0
        %459 = vmatprep.subr.mxu0 0.0
        %460 = vmatpush1.msra.mxu0 0.0
        %461 = vmatprep.subr.mxu0 0.0
        %462 = vmatpush1.msra.mxu0 0.0
        %463 = vmatprep.subr.mxu0 0.0
        %464 = vmatpush1.msra.mxu0 0.0
        %465 = vmatprep.subr.mxu0 0.0
        %466 = vmatpush1.msra.mxu0 0.0
        %467 = vmatprep.subr.mxu0 0.0
        %468 = vmatpush1.msra.mxu0 0.0
        %469 = vmatprep.subr.mxu0 0.0
        %470 = vmatpush1.msra.mxu0 0.0
        %471 = vmatprep.subr.mxu0 0.0
        %472 = vmatpush1.msra.mxu0 0.0
        %473 = vmatprep.subr.mxu0 0.0
        %474 = vmatpush1.msra.mxu0 0.0
        %475 = vmatprep.subr.mxu0 0.0
        %476 = vmatpush1.msra.mxu0 0.0
        %477 = vmatprep.subr.mxu0 0.0
        %478 = vmatpush1.msra.mxu0 0.0
        %479 = vmatprep.subr.mxu0 0.0
        %480 = vmatpush1.msra.mxu0 0.0
        %481 = vmatprep.subr.mxu0 0.0
        %482 = vmatpush1.msra.mxu0 0.0
        %483 = vmatprep.subr.mxu0 0.0
        %484 = vmatpush1.msra.mxu0 0.0
        %485 = vmatprep.subr.mxu0 0.0
        %486 = vmatpush1.msra.mxu0 0.0
        %487 = vmatprep.subr.mxu0 0.0
        %488 = vmatpush1.msra.mxu0 0.0
        %489 = vmatprep.subr.mxu0 0.0
        %490 = vmatpush1.msra.mxu0 0.0
        %491 = vmatprep.subr.mxu0 0.0
        %492 = vmatpush1.msra.mxu0 0.0
        %493 = vmatprep.subr.mxu0 0.0
        %494 = vmatpush1.msra.mxu0 0.0
        %495 = vmatprep.subr.mxu0 0.0
        %496 = vmatpush1.msra.mxu0 0.0
        %497 = vmatprep.subr.mxu0 0.0
        %498 = vmatpush1.msra.mxu0 0.0
        %499 = vmatprep.subr.mxu0 0.0
        %500 = vmatpush1.msra.mxu0 0.0
        %501 = vmatprep.subr.mxu0 0.0
        %502 = vmatpush1.msra.mxu0 0.0
        %503 = vmatprep.subr.mxu0 0.0
        %504 = vmatpush1.msra.mxu0 0.0
        %505 = vmatprep.mubr.f32.mxu0 0.0
        %506 = vmatmul.mubr.f32.gmra.mrb[0].mxu0 %v439
        %v507 = vpop.f32.mrb[0].mxu0
        %v508 = vadd.f32 0.0, %v507
        %v509 = vpop.f32.mrb[0].mxu0
        %510 = vdwg.mxu0
        %v511 = vadd.f32 %v437, %v508
        %512 = vst.msk [vmem:[#allocation5] sm:$0xff] %vm330, %v511
        %513 = vst.msk [vmem:[#allocation3] sm:$0xff] %vm429, %v411
        %v514 = vld [vmem:[#allocation2] sm:$0xff]
        %516 = vrot.lane.b32.xlu0 %v514, 120
        %v517 = vpop.permute.xlu0 %516
        %518 = vrot.lane.b32.xlu0 %v327, 120
        %v519 = vpop.permute.xlu0 %518
        %v520 = vsel %vm330, %v517, 0
        %v522 = vsel %vm330, %v519, 0
        %524 = vmatprep.subr.mxu0 0.0
        %525 = vmatpush1.xpose.msra.mxu0 %v522
        %526 = vmatprep.subr.mxu0 0.0
        %527 = vmatpush1.xpose.msra.mxu0 0.0
        %528 = vmatprep.subr.mxu0 0.0
        %529 = vmatpush1.xpose.msra.mxu0 0.0
        %530 = vmatprep.subr.mxu0 0.0
        %531 = vmatpush1.xpose.msra.mxu0 0.0
        %532 = vmatprep.subr.mxu0 0.0
        %533 = vmatpush1.xpose.msra.mxu0 0.0
        %534 = vmatprep.subr.mxu0 0.0
        %535 = vmatpush1.xpose.msra.mxu0 0.0
        %536 = vmatprep.subr.mxu0 0.0
        %537 = vmatpush1.xpose.msra.mxu0 0.0
        %538 = vmatprep.subr.mxu0 0.0
        %539 = vmatpush1.xpose.msra.mxu0 0.0
        %540 = vmatprep.subr.mxu0 0.0
        %541 = vmatpush1.xpose.msra.mxu0 0.0
        %542 = vmatprep.subr.mxu0 0.0
        %543 = vmatpush1.xpose.msra.mxu0 0.0
        %544 = vmatprep.subr.mxu0 0.0
        %545 = vmatpush1.xpose.msra.mxu0 0.0
        %546 = vmatprep.subr.mxu0 0.0
        %547 = vmatpush1.xpose.msra.mxu0 0.0
        %548 = vmatprep.subr.mxu0 0.0
        %549 = vmatpush1.xpose.msra.mxu0 0.0
        %550 = vmatprep.subr.mxu0 0.0
        %551 = vmatpush1.xpose.msra.mxu0 0.0
        %552 = vmatprep.subr.mxu0 0.0
        %553 = vmatpush1.xpose.msra.mxu0 0.0
        %554 = vmatprep.subr.mxu0 0.0
        %555 = vmatpush1.xpose.msra.mxu0 0.0
        %556 = vmatprep.subr.mxu0 0.0
        %557 = vmatpush1.xpose.msra.mxu0 0.0
        %558 = vmatprep.subr.mxu0 0.0
        %559 = vmatpush1.xpose.msra.mxu0 0.0
        %560 = vmatprep.subr.mxu0 0.0
        %561 = vmatpush1.xpose.msra.mxu0 0.0
        %562 = vmatprep.subr.mxu0 0.0
        %563 = vmatpush1.xpose.msra.mxu0 0.0
        %564 = vmatprep.subr.mxu0 0.0
        %565 = vmatpush1.xpose.msra.mxu0 0.0
        %566 = vmatprep.subr.mxu0 0.0
        %567 = vmatpush1.xpose.msra.mxu0 0.0
        %568 = vmatprep.subr.mxu0 0.0
        %569 = vmatpush1.xpose.msra.mxu0 0.0
        %570 = vmatprep.subr.mxu0 0.0
        %571 = vmatpush1.xpose.msra.mxu0 0.0
        %572 = vmatprep.subr.mxu0 0.0
        %573 = vmatpush1.xpose.msra.mxu0 0.0
        %574 = vmatprep.subr.mxu0 0.0
        %575 = vmatpush1.xpose.msra.mxu0 0.0
        %576 = vmatprep.subr.mxu0 0.0
        %577 = vmatpush1.xpose.msra.mxu0 0.0
        %578 = vmatprep.subr.mxu0 0.0
        %579 = vmatpush1.xpose.msra.mxu0 0.0
        %580 = vmatprep.subr.mxu0 0.0
        %581 = vmatpush1.xpose.msra.mxu0 0.0
        %582 = vmatprep.subr.mxu0 0.0
        %583 = vmatpush1.xpose.msra.mxu0 0.0
        %584 = vmatprep.subr.mxu0 0.0
        %585 = vmatpush1.xpose.msra.mxu0 0.0
        %586 = vmatprep.subr.mxu0 0.0
        %587 = vmatpush1.xpose.msra.mxu0 0.0
        %588 = vmatprep.mubr.f32.mxu0 0.0
        %589 = vmatmul.mubr.f32.gmra.mrb[0].mxu0 %v520
        %v590 = vpop.f32.mrb[0].mxu0
        %v591 = vadd.f32 0.0, %v590
        %v592 = vpop.f32.mrb[0].mxu0
        %593 = vdwg.mxu0
        %s594 = scalar_lea.vmem [#allocation3], 8
        %v595 = vld [vmem:[%s594] sm:$0xff]
        %v596 = vsel %vm330, %v591, -inf
        %597 = vmax.xlane.f32.xlu0 %v596
        %v598 = vpop.xlane.xlu0 %597
        %v599 = vmax.f32 %v595, %v598
        %v600 = vsub.f32 %v595, %v599
        %v601 = vmul.f32 %v600, 1.442695
        %v602 = vpow.pop %v601
        %604 = vset.pattern.permute.xlu0 0
        %605 = vperm.xlu0 %604, %v599
        %v606 = vpop.permute.xlu0 %605
        %v608 = vsub.f32 %v591, %v606
        %v609 = vmul.f32 %v608, 1.442695
        %v610 = vpow.pop %v609
        %s611 = scalar_lea.vmem [#allocation4], 8
        %v612 = vld [vmem:[%s611] sm:$0xff]
        %v613 = vmul.f32 %v602, %v612
        %v614 = vsel %vm330, %v610, 0.0
        %615 = vadd.xlane.f32.xlu0 %v614
        %v616 = vpop.xlane.xlu0 %615
        %v617 = vadd.f32 %v613, %v616
        %618 = vst.msk [vmem:[%s611] sm:$0xff] %vm429, %v617
        %s619 = scalar_lea.vmem [#allocation5], 8
        %v620 = vld [vmem:[%s619] sm:$0xff]
        %622 = vset.pattern.permute.xlu0 0
        %623 = vperm.xlu0 %622, %v602
        %v624 = vpop.permute.xlu0 %623
        %v626 = vmul.f32 %v624, %v620
        %628 = vrot.lane.b32.xlu0 %v328, 120
        %v629 = vpop.permute.xlu0 %628
        %v632 = vsel %vm330, %v610, 0
        %634 = vmatprep.subr.mxu0 0.0
        %635 = vmatpush1.msra.mxu0 %v629
        %636 = vmatprep.subr.mxu0 0.0
        %637 = vmatpush1.msra.mxu0 0.0
        %638 = vmatprep.subr.mxu0 0.0
        %639 = vmatpush1.msra.mxu0 0.0
        %640 = vmatprep.subr.mxu0 0.0
        %641 = vmatpush1.msra.mxu0 0.0
        %642 = vmatprep.subr.mxu0 0.0
        %643 = vmatpush1.msra.mxu0 0.0
        %644 = vmatprep.subr.mxu0 0.0
        %645 = vmatpush1.msra.mxu0 0.0
        %646 = vmatprep.subr.mxu0 0.0
        %647 = vmatpush1.msra.mxu0 0.0
        %648 = vmatprep.subr.mxu0 0.0
        %649 = vmatpush1.msra.mxu0 0.0
        %650 = vmatprep.subr.mxu0 0.0
        %651 = vmatpush1.msra.mxu0 0.0
        %652 = vmatprep.subr.mxu0 0.0
        %653 = vmatpush1.msra.mxu0 0.0
        %654 = vmatprep.subr.mxu0 0.0
        %655 = vmatpush1.msra.mxu0 0.0
        %656 = vmatprep.subr.mxu0 0.0
        %657 = vmatpush1.msra.mxu0 0.0
        %658 = vmatprep.subr.mxu0 0.0
        %659 = vmatpush1.msra.mxu0 0.0
        %660 = vmatprep.subr.mxu0 0.0
        %661 = vmatpush1.msra.mxu0 0.0
        %662 = vmatprep.subr.mxu0 0.0
        %663 = vmatpush1.msra.mxu0 0.0
        %664 = vmatprep.subr.mxu0 0.0
        %665 = vmatpush1.msra.mxu0 0.0
        %666 = vmatprep.subr.mxu0 0.0
        %667 = vmatpush1.msra.mxu0 0.0
        %668 = vmatprep.subr.mxu0 0.0
        %669 = vmatpush1.msra.mxu0 0.0
        %670 = vmatprep.subr.mxu0 0.0
        %671 = vmatpush1.msra.mxu0 0.0
        %672 = vmatprep.subr.mxu0 0.0
        %673 = vmatpush1.msra.mxu0 0.0
        %674 = vmatprep.subr.mxu0 0.0
        %675 = vmatpush1.msra.mxu0 0.0
        %676 = vmatprep.subr.mxu0 0.0
        %677 = vmatpush1.msra.mxu0 0.0
        %678 = vmatprep.subr.mxu0 0.0
        %679 = vmatpush1.msra.mxu0 0.0
        %680 = vmatprep.subr.mxu0 0.0
        %681 = vmatpush1.msra.mxu0 0.0
        %682 = vmatprep.subr.mxu0 0.0
        %683 = vmatpush1.msra.mxu0 0.0
        %684 = vmatprep.subr.mxu0 0.0
        %685 = vmatpush1.msra.mxu0 0.0
        %686 = vmatprep.subr.mxu0 0.0
        %687 = vmatpush1.msra.mxu0 0.0
        %688 = vmatprep.subr.mxu0 0.0
        %689 = vmatpush1.msra.mxu0 0.0
        %690 = vmatprep.subr.mxu0 0.0
        %691 = vmatpush1.msra.mxu0 0.0
        %692 = vmatprep.subr.mxu0 0.0
        %693 = vmatpush1.msra.mxu0 0.0
        %694 = vmatprep.subr.mxu0 0.0
        %695 = vmatpush1.msra.mxu0 0.0
        %696 = vmatprep.subr.mxu0 0.0
        %697 = vmatpush1.msra.mxu0 0.0
        %698 = vmatprep.mubr.f32.mxu0 0.0
        %699 = vmatmul.mubr.f32.gmra.mrb[0].mxu0 %v632
        %v700 = vpop.f32.mrb[0].mxu0
        %v701 = vadd.f32 0.0, %v700
        %v702 = vpop.f32.mrb[0].mxu0
        %703 = vdwg.mxu0
        %v704 = vadd.f32 %v626, %v701
        %705 = vst.msk [vmem:[%s619] sm:$0xff] %vm330, %v704
        %706 = vst.msk [vmem:[%s594] sm:$0xff] %vm429, %v599
        %v707 = vld [vmem:[#allocation2] sm:$0xff]
        %709 = vrot.lane.b32.xlu0 %v707, 112
        %v710 = vpop.permute.xlu0 %709
        %711 = vrot.lane.b32.xlu0 %v327, 112
        %v712 = vpop.permute.xlu0 %711
        %v713 = vsel %vm330, %v710, 0
        %v715 = vsel %vm330, %v712, 0
        %717 = vmatprep.subr.mxu0 0.0
        %718 = vmatpush1.xpose.msra.mxu0 %v715
        %719 = vmatprep.subr.mxu0 0.0
        %720 = vmatpush1.xpose.msra.mxu0 0.0
        %721 = vmatprep.subr.mxu0 0.0
        %722 = vmatpush1.xpose.msra.mxu0 0.0
        %723 = vmatprep.subr.mxu0 0.0
        %724 = vmatpush1.xpose.msra.mxu0 0.0
        %725 = vmatprep.subr.mxu0 0.0
        %726 = vmatpush1.xpose.msra.mxu0 0.0
        %727 = vmatprep.subr.mxu0 0.0
        %728 = vmatpush1.xpose.msra.mxu0 0.0
        %729 = vmatprep.subr.mxu0 0.0
        %730 = vmatpush1.xpose.msra.mxu0 0.0
        %731 = vmatprep.subr.mxu0 0.0
        %732 = vmatpush1.xpose.msra.mxu0 0.0
        %733 = vmatprep.subr.mxu0 0.0
        %734 = vmatpush1.xpose.msra.mxu0 0.0
        %735 = vmatprep.subr.mxu0 0.0
        %736 = vmatpush1.xpose.msra.mxu0 0.0
        %737 = vmatprep.subr.mxu0 0.0
        %738 = vmatpush1.xpose.msra.mxu0 0.0
        %739 = vmatprep.subr.mxu0 0.0
        %740 = vmatpush1.xpose.msra.mxu0 0.0
        %741 = vmatprep.subr.mxu0 0.0
        %742 = vmatpush1.xpose.msra.mxu0 0.0
        %743 = vmatprep.subr.mxu0 0.0
        %744 = vmatpush1.xpose.msra.mxu0 0.0
        %745 = vmatprep.subr.mxu0 0.0
        %746 = vmatpush1.xpose.msra.mxu0 0.0
        %747 = vmatprep.subr.mxu0 0.0
        %748 = vmatpush1.xpose.msra.mxu0 0.0
        %749 = vmatprep.subr.mxu0 0.0
        %750 = vmatpush1.xpose.msra.mxu0 0.0
        %751 = vmatprep.subr.mxu0 0.0
        %752 = vmatpush1.xpose.msra.mxu0 0.0
        %753 = vmatprep.subr.mxu0 0.0
        %754 = vmatpush1.xpose.msra.mxu0 0.0
        %755 = vmatprep.subr.mxu0 0.0
        %756 = vmatpush1.xpose.msra.mxu0 0.0
        %757 = vmatprep.subr.mxu0 0.0
        %758 = vmatpush1.xpose.msra.mxu0 0.0
        %759 = vmatprep.subr.mxu0 0.0
        %760 = vmatpush1.xpose.msra.mxu0 0.0
        %761 = vmatprep.subr.mxu0 0.0
        %762 = vmatpush1.xpose.msra.mxu0 0.0
        %763 = vmatprep.subr.mxu0 0.0
        %764 = vmatpush1.xpose.msra.mxu0 0.0
        %765 = vmatprep.subr.mxu0 0.0
        %766 = vmatpush1.xpose.msra.mxu0 0.0
        %767 = vmatprep.subr.mxu0 0.0
        %768 = vmatpush1.xpose.msra.mxu0 0.0
        %769 = vmatprep.subr.mxu0 0.0
        %770 = vmatpush1.xpose.msra.mxu0 0.0
        %771 = vmatprep.subr.mxu0 0.0
        %772 = vmatpush1.xpose.msra.mxu0 0.0
        %773 = vmatprep.subr.mxu0 0.0
        %774 = vmatpush1.xpose.msra.mxu0 0.0
        %775 = vmatprep.subr.mxu0 0.0
        %776 = vmatpush1.xpose.msra.mxu0 0.0
        %777 = vmatprep.subr.mxu0 0.0
        %778 = vmatpush1.xpose.msra.mxu0 0.0
        %779 = vmatprep.subr.mxu0 0.0
        %780 = vmatpush1.xpose.msra.mxu0 0.0
        %781 = vmatprep.mubr.f32.mxu0 0.0
        %782 = vmatmul.mubr.f32.gmra.mrb[0].mxu0 %v713
        %v783 = vpop.f32.mrb[0].mxu0
        %v784 = vadd.f32 0.0, %v783
        %v785 = vpop.f32.mrb[0].mxu0
        %786 = vdwg.mxu0
        %s787 = scalar_lea.vmem [#allocation3], 16
        %v788 = vld [vmem:[%s787] sm:$0xff]
        %v789 = vsel %vm330, %v784, -inf
        %790 = vmax.xlane.f32.xlu0 %v789
        %v791 = vpop.xlane.xlu0 %790
        %v792 = vmax.f32 %v788, %v791
        %v793 = vsub.f32 %v788, %v792
        %v794 = vmul.f32 %v793, 1.442695
        %v795 = vpow.pop %v794
        %797 = vset.pattern.permute.xlu0 0
        %798 = vperm.xlu0 %797, %v792
        %v799 = vpop.permute.xlu0 %798
        %v801 = vsub.f32 %v784, %v799
        %v802 = vmul.f32 %v801, 1.442695
        %v803 = vpow.pop %v802
        %s804 = scalar_lea.vmem [#allocation4], 16
        %v805 = vld [vmem:[%s804] sm:$0xff]
        %v806 = vmul.f32 %v795, %v805
        %v807 = vsel %vm330, %v803, 0.0
        %808 = vadd.xlane.f32.xlu0 %v807
        %v809 = vpop.xlane.xlu0 %808
        %v810 = vadd.f32 %v806, %v809
        %811 = vst.msk [vmem:[%s804] sm:$0xff] %vm429, %v810
        %s812 = scalar_lea.vmem [#allocation5], 16
        %v813 = vld [vmem:[%s812] sm:$0xff]
        %815 = vset.pattern.permute.xlu0 0
        %816 = vperm.xlu0 %815, %v795
        %v817 = vpop.permute.xlu0 %816
        %v819 = vmul.f32 %v817, %v813
        %820 = vrot.lane.b32.xlu0 %v328, 112
        %v821 = vpop.permute.xlu0 %820
        %v824 = vsel %vm330, %v803, 0
        %826 = vmatprep.subr.mxu0 0.0
        %827 = vmatpush1.msra.mxu0 %v821
        %828 = vmatprep.subr.mxu0 0.0
        %829 = vmatpush1.msra.mxu0 0.0
        %830 = vmatprep.subr.mxu0 0.0
        %831 = vmatpush1.msra.mxu0 0.0
        %832 = vmatprep.subr.mxu0 0.0
        %833 = vmatpush1.msra.mxu0 0.0
        %834 = vmatprep.subr.mxu0 0.0
        %835 = vmatpush1.msra.mxu0 0.0
        %836 = vmatprep.subr.mxu0 0.0
        %837 = vmatpush1.msra.mxu0 0.0
        %838 = vmatprep.subr.mxu0 0.0
        %839 = vmatpush1.msra.mxu0 0.0
        %840 = vmatprep.subr.mxu0 0.0
        %841 = vmatpush1.msra.mxu0 0.0
        %842 = vmatprep.subr.mxu0 0.0
        %843 = vmatpush1.msra.mxu0 0.0
        %844 = vmatprep.subr.mxu0 0.0
        %845 = vmatpush1.msra.mxu0 0.0
        %846 = vmatprep.subr.mxu0 0.0
        %847 = vmatpush1.msra.mxu0 0.0
        %848 = vmatprep.subr.mxu0 0.0
        %849 = vmatpush1.msra.mxu0 0.0
        %850 = vmatprep.subr.mxu0 0.0
        %851 = vmatpush1.msra.mxu0 0.0
        %852 = vmatprep.subr.mxu0 0.0
        %853 = vmatpush1.msra.mxu0 0.0
        %854 = vmatprep.subr.mxu0 0.0
        %855 = vmatpush1.msra.mxu0 0.0
        %856 = vmatprep.subr.mxu0 0.0
        %857 = vmatpush1.msra.mxu0 0.0
        %858 = vmatprep.subr.mxu0 0.0
        %859 = vmatpush1.msra.mxu0 0.0
        %860 = vmatprep.subr.mxu0 0.0
        %861 = vmatpush1.msra.mxu0 0.0
        %862 = vmatprep.subr.mxu0 0.0
        %863 = vmatpush1.msra.mxu0 0.0
        %864 = vmatprep.subr.mxu0 0.0
        %865 = vmatpush1.msra.mxu0 0.0
        %866 = vmatprep.subr.mxu0 0.0
        %867 = vmatpush1.msra.mxu0 0.0
        %868 = vmatprep.subr.mxu0 0.0
        %869 = vmatpush1.msra.mxu0 0.0
        %870 = vmatprep.subr.mxu0 0.0
        %871 = vmatpush1.msra.mxu0 0.0
        %872 = vmatprep.subr.mxu0 0.0
        %873 = vmatpush1.msra.mxu0 0.0
        %874 = vmatprep.subr.mxu0 0.0
        %875 = vmatpush1.msra.mxu0 0.0
        %876 = vmatprep.subr.mxu0 0.0
        %877 = vmatpush1.msra.mxu0 0.0
        %878 = vmatprep.subr.mxu0 0.0
        %879 = vmatpush1.msra.mxu0 0.0
        %880 = vmatprep.subr.mxu0 0.0
        %881 = vmatpush1.msra.mxu0 0.0
        %882 = vmatprep.subr.mxu0 0.0
        %883 = vmatpush1.msra.mxu0 0.0
        %884 = vmatprep.subr.mxu0 0.0
        %885 = vmatpush1.msra.mxu0 0.0
        %886 = vmatprep.subr.mxu0 0.0
        %887 = vmatpush1.msra.mxu0 0.0
        %888 = vmatprep.subr.mxu0 0.0
        %889 = vmatpush1.msra.mxu0 0.0
        %890 = vmatprep.mubr.f32.mxu0 0.0
        %891 = vmatmul.mubr.f32.gmra.mrb[0].mxu0 %v824
        %v892 = vpop.f32.mrb[0].mxu0
        %v893 = vadd.f32 0.0, %v892
        %v894 = vpop.f32.mrb[0].mxu0
        %895 = vdwg.mxu0
        %v896 = vadd.f32 %v819, %v893
        %897 = vst.msk [vmem:[%s812] sm:$0xff] %vm330, %v896
        %898 = vst.msk [vmem:[%s787] sm:$0xff] %vm429, %v792
        %v899 = vld [vmem:[#allocation2] sm:$0xff]
        %901 = vrot.lane.b32.xlu0 %v899, 104
        %v902 = vpop.permute.xlu0 %901
        %903 = vrot.lane.b32.xlu0 %v327, 104
        %v904 = vpop.permute.xlu0 %903
        %v905 = vsel %vm330, %v902, 0
        %v907 = vsel %vm330, %v904, 0
        %909 = vmatprep.subr.mxu0 0.0
        %910 = vmatpush1.xpose.msra.mxu0 %v907
        %911 = vmatprep.subr.mxu0 0.0
        %912 = vmatpush1.xpose.msra.mxu0 0.0
        %913 = vmatprep.subr.mxu0 0.0
        %914 = vmatpush1.xpose.msra.mxu0 0.0
        %915 = vmatprep.subr.mxu0 0.0
        %916 = vmatpush1.xpose.msra.mxu0 0.0
        %917 = vmatprep.subr.mxu0 0.0
        %918 = vmatpush1.xpose.msra.mxu0 0.0
        %919 = vmatprep.subr.mxu0 0.0
        %920 = vmatpush1.xpose.msra.mxu0 0.0
        %921 = vmatprep.subr.mxu0 0.0
        %922 = vmatpush1.xpose.msra.mxu0 0.0
        %923 = vmatprep.subr.mxu0 0.0
        %924 = vmatpush1.xpose.msra.mxu0 0.0
        %925 = vmatprep.subr.mxu0 0.0
        %926 = vmatpush1.xpose.msra.mxu0 0.0
        %927 = vmatprep.subr.mxu0 0.0
        %928 = vmatpush1.xpose.msra.mxu0 0.0
        %929 = vmatprep.subr.mxu0 0.0
        %930 = vmatpush1.xpose.msra.mxu0 0.0
        %931 = vmatprep.subr.mxu0 0.0
        %932 = vmatpush1.xpose.msra.mxu0 0.0
        %933 = vmatprep.subr.mxu0 0.0
        %934 = vmatpush1.xpose.msra.mxu0 0.0
        %935 = vmatprep.subr.mxu0 0.0
        %936 = vmatpush1.xpose.msra.mxu0 0.0
        %937 = vmatprep.subr.mxu0 0.0
        %938 = vmatpush1.xpose.msra.mxu0 0.0
        %939 = vmatprep.subr.mxu0 0.0
        %940 = vmatpush1.xpose.msra.mxu0 0.0
        %941 = vmatprep.subr.mxu0 0.0
        %942 = vmatpush1.xpose.msra.mxu0 0.0
        %943 = vmatprep.subr.mxu0 0.0
        %944 = vmatpush1.xpose.msra.mxu0 0.0
        %945 = vmatprep.subr.mxu0 0.0
        %946 = vmatpush1.xpose.msra.mxu0 0.0
        %947 = vmatprep.subr.mxu0 0.0
        %948 = vmatpush1.xpose.msra.mxu0 0.0
        %949 = vmatprep.subr.mxu0 0.0
        %950 = vmatpush1.xpose.msra.mxu0 0.0
        %951 = vmatprep.subr.mxu0 0.0
        %952 = vmatpush1.xpose.msra.mxu0 0.0
        %953 = vmatprep.subr.mxu0 0.0
        %954 = vmatpush1.xpose.msra.mxu0 0.0
        %955 = vmatprep.subr.mxu0 0.0
        %956 = vmatpush1.xpose.msra.mxu0 0.0
        %957 = vmatprep.subr.mxu0 0.0
        %958 = vmatpush1.xpose.msra.mxu0 0.0
        %959 = vmatprep.subr.mxu0 0.0
        %960 = vmatpush1.xpose.msra.mxu0 0.0
        %961 = vmatprep.subr.mxu0 0.0
        %962 = vmatpush1.xpose.msra.mxu0 0.0
        %963 = vmatprep.subr.mxu0 0.0
        %964 = vmatpush1.xpose.msra.mxu0 0.0
        %965 = vmatprep.subr.mxu0 0.0
        %966 = vmatpush1.xpose.msra.mxu0 0.0
        %967 = vmatprep.subr.mxu0 0.0
        %968 = vmatpush1.xpose.msra.mxu0 0.0
        %969 = vmatprep.subr.mxu0 0.0
        %970 = vmatpush1.xpose.msra.mxu0 0.0
        %971 = vmatprep.subr.mxu0 0.0
        %972 = vmatpush1.xpose.msra.mxu0 0.0
        %973 = vmatprep.mubr.f32.mxu0 0.0
        %974 = vmatmul.mubr.f32.gmra.mrb[0].mxu0 %v905
        %v975 = vpop.f32.mrb[0].mxu0
        %v976 = vadd.f32 0.0, %v975
        %v977 = vpop.f32.mrb[0].mxu0
        %978 = vdwg.mxu0
        %s979 = scalar_lea.vmem [#allocation3], 24
        %v980 = vld [vmem:[%s979] sm:$0xff]
        %v981 = vsel %vm330, %v976, -inf
        %982 = vmax.xlane.f32.xlu0 %v981
        %v983 = vpop.xlane.xlu0 %982
        %v984 = vmax.f32 %v980, %v983
        %v985 = vsub.f32 %v980, %v984
        %v986 = vmul.f32 %v985, 1.442695
        %v987 = vpow.pop %v986
        %989 = vset.pattern.permute.xlu0 0
        %990 = vperm.xlu0 %989, %v984
        %v991 = vpop.permute.xlu0 %990
        %v993 = vsub.f32 %v976, %v991
        %v994 = vmul.f32 %v993, 1.442695
        %v995 = vpow.pop %v994
        %s996 = scalar_lea.vmem [#allocation4], 24
        %v997 = vld [vmem:[%s996] sm:$0xff]
        %v998 = vmul.f32 %v987, %v997
        %v999 = vsel %vm330, %v995, 0.0
        %1000 = vadd.xlane.f32.xlu0 %v999
        %v1001 = vpop.xlane.xlu0 %1000
        %v1002 = vadd.f32 %v998, %v1001
        %1003 = vst.msk [vmem:[%s996] sm:$0xff] %vm429, %v1002
        %s1004 = scalar_lea.vmem [#allocation5], 24
        %v1005 = vld [vmem:[%s1004] sm:$0xff]
        %1007 = vset.pattern.permute.xlu0 0
        %1008 = vperm.xlu0 %1007, %v987
        %v1009 = vpop.permute.xlu0 %1008
        %v1011 = vmul.f32 %v1009, %v1005
        %1012 = vrot.lane.b32.xlu0 %v328, 104
        %v1013 = vpop.permute.xlu0 %1012
        %v1016 = vsel %vm330, %v995, 0
        %1018 = vmatprep.subr.mxu0 0.0
        %1019 = vmatpush1.msra.mxu0 %v1013
        %1020 = vmatprep.subr.mxu0 0.0
        %1021 = vmatpush1.msra.mxu0 0.0
        %1022 = vmatprep.subr.mxu0 0.0
        %1023 = vmatpush1.msra.mxu0 0.0
        %1024 = vmatprep.subr.mxu0 0.0
        %1025 = vmatpush1.msra.mxu0 0.0
        %1026 = vmatprep.subr.mxu0 0.0
        %1027 = vmatpush1.msra.mxu0 0.0
        %1028 = vmatprep.subr.mxu0 0.0
        %1029 = vmatpush1.msra.mxu0 0.0
        %1030 = vmatprep.subr.mxu0 0.0
        %1031 = vmatpush1.msra.mxu0 0.0
        %1032 = vmatprep.subr.mxu0 0.0
        %1033 = vmatpush1.msra.mxu0 0.0
        %1034 = vmatprep.subr.mxu0 0.0
        %1035 = vmatpush1.msra.mxu0 0.0
        %1036 = vmatprep.subr.mxu0 0.0
        %1037 = vmatpush1.msra.mxu0 0.0
        %1038 = vmatprep.subr.mxu0 0.0
        %1039 = vmatpush1.msra.mxu0 0.0
        %1040 = vmatprep.subr.mxu0 0.0
        %1041 = vmatpush1.msra.mxu0 0.0
        %1042 = vmatprep.subr.mxu0 0.0
        %1043 = vmatpush1.msra.mxu0 0.0
        %1044 = vmatprep.subr.mxu0 0.0
        %1045 = vmatpush1.msra.mxu0 0.0
        %1046 = vmatprep.subr.mxu0 0.0
        %1047 = vmatpush1.msra.mxu0 0.0
        %1048 = vmatprep.subr.mxu0 0.0
        %1049 = vmatpush1.msra.mxu0 0.0
        %1050 = vmatprep.subr.mxu0 0.0
        %1051 = vmatpush1.msra.mxu0 0.0
        %1052 = vmatprep.subr.mxu0 0.0
        %1053 = vmatpush1.msra.mxu0 0.0
        %1054 = vmatprep.subr.mxu0 0.0
        %1055 = vmatpush1.msra.mxu0 0.0
        %1056 = vmatprep.subr.mxu0 0.0
        %1057 = vmatpush1.msra.mxu0 0.0
        %1058 = vmatprep.subr.mxu0 0.0
        %1059 = vmatpush1.msra.mxu0 0.0
        %1060 = vmatprep.subr.mxu0 0.0
        %1061 = vmatpush1.msra.mxu0 0.0
        %1062 = vmatprep.subr.mxu0 0.0
        %1063 = vmatpush1.msra.mxu0 0.0
        %1064 = vmatprep.subr.mxu0 0.0
        %1065 = vmatpush1.msra.mxu0 0.0
        %1066 = vmatprep.subr.mxu0 0.0
        %1067 = vmatpush1.msra.mxu0 0.0
        %1068 = vmatprep.subr.mxu0 0.0
        %1069 = vmatpush1.msra.mxu0 0.0
        %1070 = vmatprep.subr.mxu0 0.0
        %1071 = vmatpush1.msra.mxu0 0.0
        %1072 = vmatprep.subr.mxu0 0.0
        %1073 = vmatpush1.msra.mxu0 0.0
        %1074 = vmatprep.subr.mxu0 0.0
        %1075 = vmatpush1.msra.mxu0 0.0
        %1076 = vmatprep.subr.mxu0 0.0
        %1077 = vmatpush1.msra.mxu0 0.0
        %1078 = vmatprep.subr.mxu0 0.0
        %1079 = vmatpush1.msra.mxu0 0.0
        %1080 = vmatprep.subr.mxu0 0.0
        %1081 = vmatpush1.msra.mxu0 0.0
        %1082 = vmatprep.mubr.f32.mxu0 0.0
        %1083 = vmatmul.mubr.f32.gmra.mrb[0].mxu0 %v1016
        %v1084 = vpop.f32.mrb[0].mxu0
        %v1085 = vadd.f32 0.0, %v1084
        %v1086 = vpop.f32.mrb[0].mxu0
        %1087 = vdwg.mxu0
        %v1088 = vadd.f32 %v1011, %v1085
        %1089 = vst.msk [vmem:[%s1004] sm:$0xff] %vm330, %v1088
        %1090 = vst.msk [vmem:[%s979] sm:$0xff] %vm429, %v984
        // Predicated region
        $region49: #{tpu_custom_call.1} parent=31 // pred_check
          %p1091 = pneg %p305
        $region50: #{tpu_custom_call.1} parent=31 // pred_check_branch
          %1093 = sbr.rel (%p1091) target = $region52
        $region51: #{tpu_custom_call.1} parent=31 // pred_region
          %v1094 = vld [vmem:[#allocation4] sm:$0xff]
          %v1095 = vrcp.pop %v1094
          %v1096 = vld [vmem:[#allocation5] sm:$0xff]
          %1098 = vset.pattern.permute.xlu0 0
          %1099 = vperm.xlu0 %1098, %v1095
          %v1100 = vpop.permute.xlu0 %1099
          %v1102 = vmul.f32 %v1096, %v1100
          %1103 = vst.msk [vmem:[%s304] sm:$0xff] %vm330, %v1102
          %v1104 = vld [vmem:[%s611] sm:$0xff]
          %v1105 = vrcp.pop %v1104
          %v1106 = vld [vmem:[%s619] sm:$0xff]
          %1108 = vset.pattern.permute.xlu0 0
          %1109 = vperm.xlu0 %1108, %v1105
          %v1110 = vpop.permute.xlu0 %1109
          %v1112 = vmul.f32 %v1106, %v1110
          %1114 = vrot.lane.b32.xlu0 %v1112, 8
          %v1115 = vpop.permute.xlu0 %1114
          %vm1117 = vcmask 130112
          %1118 = vst.msk [vmem:[%s304] sm:$0xff] %vm1117, %v1115
          %v1119 = vld [vmem:[%s804] sm:$0xff]
          %v1120 = vrcp.pop %v1119
          %v1121 = vld [vmem:[%s812] sm:$0xff]
          %1123 = vset.pattern.permute.xlu0 0
          %1124 = vperm.xlu0 %1123, %v1120
          %v1125 = vpop.permute.xlu0 %1124
          %v1127 = vmul.f32 %v1121, %v1125
          %1129 = vrot.lane.b32.xlu0 %v1127, 16
          %v1130 = vpop.permute.xlu0 %1129
          %vm1132 = vcmask 195712
          %1133 = vst.msk [vmem:[%s304] sm:$0xff] %vm1132, %v1130
          %v1134 = vld [vmem:[%s996] sm:$0xff]
          %v1135 = vrcp.pop %v1134
          %v1136 = vld [vmem:[%s1004] sm:$0xff]
          %1138 = vset.pattern.permute.xlu0 0
          %1139 = vperm.xlu0 %1138, %v1135
          %v1140 = vpop.permute.xlu0 %1139
          %v1142 = vmul.f32 %v1136, %v1140
          %1144 = vrot.lane.b32.xlu0 %v1142, 24
          %v1145 = vpop.permute.xlu0 %1144
          %vm1147 = vcmask 261312
          %1148 = vst.msk [vmem:[%s304] sm:$0xff] %vm1147, %v1145
        $region52: #{tpu_custom_call.1} parent=31 // pred_fallthru
          _
        %s1149 = sand.u32 %s151, 1
        %s1150 = scalar_lea.sflag [#allocation8], %s1149
        %s1151 = sand.u32 %s151, 1
        %s1152 = smul.addr %s1151, 8
        %s1153 = scalar_lea.vmem [#allocation12], %s1152
        // Predicated region
        $region53: #{tpu_custom_call.1} parent=31 // pred_check
          %p1154 = pneg %p161
        $region54: #{tpu_custom_call.1} parent=31 // pred_check_branch
          %1156 = sbr.rel (%p1154) target = $region56
        $region55: #{tpu_custom_call.1} parent=31 // pred_region
          %s1158 = ssub.s32 128, 128
          %1159 = vsyncadd %s1150, %s1158
          %s1160 = sadd.s32 %s30, %s31
          %s1161 = sadd.s32 %s1160, %s29
          %s1162 = smul.addr %s1161, 128
          %s1163 = scalar_lea.hbm %s3, %s1162
          %s1165 = sshll.u32 %s1153, 4
          %s1166 = int_to_ptr.vmem [resolvable:$true] %s1165
          %1168 = dma.vmem_to_hbm [thread:$0]  %s1166, 128, %s1163, %s1150
        $region56: #{tpu_custom_call.1} parent=31 // pred_fallthru
          _
      $region32: #{tpu_custom_call.1} parent=5 // pred_fallthru
        _
      %p1169 = scmp.le.s32.totalorder 2, %s18
      // Predicated region
      $region57: #{tpu_custom_call.1} parent=5 // pred_check
        %p1170 = pneg %p1169
      $region58: #{tpu_custom_call.1} parent=5 // pred_check_branch
        %1172 = sbr.rel (%p1170) target = $region60
      $region59: #{tpu_custom_call.1} parent=5 // pred_region
        %s1173 = ssub.s32 %s18, 2
        // Predicated region
        $region61: #{tpu_custom_call.1} parent=59 // pred_check
          %p1174 = pneg %p167
        $region62: #{tpu_custom_call.1} parent=59 // pred_check_branch
          %1176 = sbr.rel (%p1174) target = $region64
        $region63: #{tpu_custom_call.1} parent=59 // pred_region
          %s1177 = sand.u32 %s152, 1
          %s1178 = scalar_lea.sflag [#allocation8], %s1177
          %s1179 = sand.u32 %s152, 1
          %s1180 = smul.addr %s1179, 8
          %s1181 = scalar_lea.vmem [#allocation12], %s1180
          %1182 = dma.done %s1178, 128
        $region64: #{tpu_custom_call.1} parent=59 // pred_fallthru
          _
      $region60: #{tpu_custom_call.1} parent=5 // pred_fallthru
        _
    $region6: #{tpu_custom_call.1} parent=1 // loop_footer
      %s22 = sadd.s32 1, %s18
    $region7: #{tpu_custom_call.1} parent=1 // loop_footer_branch
      %17 = sbr.rel target = $region3
    $region8: #{tpu_custom_call.1} parent=1 // loop_exit
      _
    %1183 = vsyncpa [#allocation7], 1
    %s1184 = scalar_lea.sflag [#allocation7], 1
    %1185 = vsyncpa %s1184, 1
    %1186 = vsyncpa [#allocation10], 1
    %s1187 = scalar_lea.sflag [#allocation10], 1
    %1188 = vsyncpa %s1187, 1
    %1189 = vsyncpa [#allocation8], 1
    %s1190 = scalar_lea.sflag [#allocation8], 1
    %1191 = vsyncpa %s1190, 1

</llo_original>
